<compile_context>
chip_gen: v6e
topology: v6e:2x2x1
jax: 0.10.0
libtpu: 0.0.40
codegen_flags: <defaults>
</compile_context>

<pallas_src>
import functools

import jax
import jax.numpy as jnp
from jax.experimental import pallas as pl
from jax.experimental.pallas import tpu as pltpu

NEG_SLOPE = 0.01  # nn.LeakyReLU(negative_slope=0.01)
LANES = 128


def _lrelu(x):
    return jnp.where(x >= 0, x, NEG_SLOPE * x)


def _round_up(v, m):
    return (v + m - 1) // m * m


# ----------------------------------------------------------------------------
# Fused generator kernel (single invocation covers the whole batch)
#   x_ref   : (n_valid, Cin)         compute dtype ("gapped" flat NTC layout)
#   inw_ref : (Cin, Cmid)            compute dtype    inb_ref : (1, Cmid) f32
#   w1_ref  : (n_res*K, Cmid, Cmid)  compute dtype    b1_ref  : (n_res, 1, Cmid) f32
#   w2_ref  : (n_res*K, Cmid, Cmid)  compute dtype    b2_ref  : (n_res, 1, Cmid) f32
#   outw_ref: (Cmid, Cout)           compute dtype    outb_ref: (1, Cout) f32
#   o_ref   : (n_valid, Cout)        f32
#   pad_scr : (N*(T+2p), Cmid)       compute dtype  padded conv-input buffer
#   act_scr : (n_valid, Cmid)        f32            residual carry
# ----------------------------------------------------------------------------
def scyclone_g_kernel(x_ref, inw_ref, inb_ref, w1_ref, b1_ref, w2_ref, b2_ref,
                      outw_ref, outb_ref, o_ref, pad_scr, act_scr, *,
                      n_res, ksize, n_batch, t_len):
    K = ksize
    p = K // 2
    t_pad = t_len + 2 * p
    n_rows = n_batch * t_pad
    n_valid = n_rows - 2 * p
    c_mid = pad_scr.shape[1]
    cdt = pad_scr.dtype  # MXU compute dtype (bf16 fast path, f32 exact path)

    # Zero the conv-input scratch once: the global halos and the 2*p gap rows
    # between batch elements must stay zero so the K-tap conv never mixes
    # batch elements (interior rows are fully rewritten before every conv).
    pad_scr[...] = jnp.zeros_like(pad_scr)

    def load_conv_input(a):
        """Write an activation (f32, gapped layout) into the padded conv-input
        scratch, cast to the compute dtype, then re-zero the between-batch
        gap rows (2*p rows per gap; the global halo rows are never written)."""
        pad_scr[pl.ds(p, n_valid), :] = a.astype(cdt)
        for n in range(n_batch - 1):
            pad_scr[pl.ds(n * t_pad + t_len + p, 2 * p), :] = jnp.zeros(
                (2 * p, c_mid), dtype=cdt)

    def conv_k(w_ref, r, b):
        """K-tap conv1d as K accumulated MXU dots on shifted views of the
        padded scratch (no im2col temporary); f32 accumulation + f32 bias."""
        acc = jnp.dot(pad_scr[pl.ds(0, n_valid), :], w_ref[r * K],
                      preferred_element_type=jnp.float32)
        for k in range(1, K):
            acc = acc + jnp.dot(pad_scr[pl.ds(k, n_valid), :],
                                w_ref[r * K + k],
                                preferred_element_type=jnp.float32)
        return acc + b

    # ---- 1x1 in-projection + LeakyReLU (one dot, batch folded into M) -------
    act_scr[...] = _lrelu(
        jnp.dot(x_ref[...], inw_ref[...], preferred_element_type=jnp.float32)
        + inb_ref[...])

    # ---- residual blocks: x + conv(lrelu(conv(x))), dynamic weight indexing -
    @pl.loop(0, n_res)
    def _(r):
        load_conv_input(act_scr[...])
        h = _lrelu(conv_k(w1_ref, r, b1_ref[r]))
        load_conv_input(h)
        act_scr[...] = act_scr[...] + conv_k(w2_ref, r, b2_ref[r])

    # ---- 1x1 out-projection + LeakyReLU (lane-dense output store) -----------
    y = jnp.dot(act_scr[...].astype(cdt), outw_ref[...],
                preferred_element_type=jnp.float32)
    o_ref[...] = _lrelu(y + outb_ref[...]).astype(o_ref.dtype)


# ----------------------------------------------------------------------------
# Parameter packing: pad channels to a lane multiple (exact: zero lanes stay
# zero through LeakyReLU / residual adds), flatten conv weights to
# (n_res*K, C, C) for dynamic per-tap indexing, cast MXU operands.
# ----------------------------------------------------------------------------
def _pack_params(params, compute_dtype):
    in_w, in_b = params["in_w"], params["in_b"]
    out_w, out_b = params["out_w"], params["out_b"]
    Cin, Cmid = in_w.shape
    Cout = out_w.shape[1]
    K = params["res"][0]["w1"].shape[0]
    Cmid_p = _round_up(Cmid, LANES)
    Cout_p = _round_up(Cout, LANES)
    dm, do = Cmid_p - Cmid, Cout_p - Cout

    def pad_w(w):  # (K, Cmid, Cmid) -> (K, Cmid_p, Cmid_p)
        return jnp.pad(w, ((0, 0), (0, dm), (0, dm)))

    packed = dict(
        in_w=jnp.pad(in_w, ((0, 0), (0, dm))).astype(compute_dtype),
        in_b=jnp.pad(in_b, ((0, 0), (0, dm))).astype(jnp.float32),
        w1=jnp.concatenate([pad_w(b["w1"]) for b in params["res"]],
                           axis=0).astype(compute_dtype),
        b1=jnp.stack([jnp.pad(b["b1"], ((0, 0), (0, dm)))
                      for b in params["res"]]).astype(jnp.float32),
        w2=jnp.concatenate([pad_w(b["w2"]) for b in params["res"]],
                           axis=0).astype(compute_dtype),
        b2=jnp.stack([jnp.pad(b["b2"], ((0, 0), (0, dm)))
                      for b in params["res"]]).astype(jnp.float32),
        out_w=jnp.pad(out_w, ((0, dm), (0, do))).astype(compute_dtype),
        out_b=jnp.pad(out_b, ((0, 0), (0, do))).astype(jnp.float32),
    )
    return packed, (Cmid_p, Cout_p, Cout, K)


# ----------------------------------------------------------------------------
# Forward wrapper: one fused, gridless pallas_call.
# ----------------------------------------------------------------------------
def scyclone_g_forward(x_nct, params, compute_dtype=jnp.bfloat16):
    """x_nct: (N, C_in, T) as in PyTorch Conv1d; returns (N, C_out, T) float32."""
    assert params["res"], "expects at least one residual block"
    N, Cin, T = x_nct.shape
    n_res = len(params["res"])
    packed, (Cmid_p, Cout_p, Cout, K) = _pack_params(params, compute_dtype)
    p = K // 2
    t_pad = T + 2 * p
    n_rows = N * t_pad
    n_valid = n_rows - 2 * p

    # NCT -> "gapped" flat NTC: per-batch (T, Cin) blocks separated by 2*p zero
    # rows, so the whole batch folds into the MXU M dimension of every matmul.
    x_ntc = jnp.transpose(x_nct, (0, 2, 1)).astype(compute_dtype)   # (N, T, Cin)
    x_flat = jnp.pad(x_ntc, ((0, 0), (0, 2 * p), (0, 0)))            # (N, t_pad, Cin)
    x_flat = x_flat.reshape(N * t_pad, Cin)[:n_valid]                # (n_valid, Cin)

    flops = 2 * n_valid * (Cin * Cmid_p + 2 * n_res * K * Cmid_p * Cmid_p
                           + Cmid_p * Cout_p)
    bytes_accessed = int(
        x_flat.size * x_flat.dtype.itemsize
        + sum(int(v.size) * v.dtype.itemsize for v in packed.values())
        + n_valid * Cout_p * 4)

    kernel = functools.partial(scyclone_g_kernel, n_res=n_res, ksize=K,
                               n_batch=N, t_len=T)

    out = pl.pallas_call(
        kernel,
        out_shape=jax.ShapeDtypeStruct((n_valid, Cout_p), jnp.float32),
        # No grid: a single step covers the whole (tiny) batch, so the constant
        # weights are loaded exactly once (nothing to double-buffer).
        scratch_shapes=[
            pltpu.VMEM((n_rows, Cmid_p), compute_dtype),   # padded conv input
            pltpu.VMEM((n_valid, Cmid_p), jnp.float32),    # f32 residual carry
        ],
        cost_estimate=pl.CostEstimate(flops=int(flops), transcendentals=0,
                                      bytes_accessed=bytes_accessed),
    )(x_flat, packed["in_w"], packed["in_b"], packed["w1"], packed["b1"],
      packed["w2"], packed["b2"], packed["out_w"], packed["out_b"])

    # Undo the gapped layout, drop lane padding, back to PyTorch's (N, C, T).
    out = jnp.pad(out, ((0, 2 * p), (0, 0))).reshape(N, t_pad, Cout_p)
    return jnp.transpose(out[:, :T, :Cout], (0, 2, 1))


# ----------------------------------------------------------------------------
# Parameters (natural layout, f32): Conv1d (Cout, Cin, K) stored as (K, Cin, Cout);
# 1x1 convs stored as (Cin, Cout).
# ----------------------------------------------------------------------------
def init_params(key, in_ch, mid_ch, out_ch, n_resblock, ksize):
    keys = jax.random.split(key, 4 + 4 * n_resblock)
    ki = iter(keys)
    scale = 0.05

    def nrm(k, shape):
        return (scale * jax.random.normal(k, shape)).astype(jnp.float32)

    params = {
        "in_w": nrm(next(ki), (in_ch, mid_ch)),
        "in_b": nrm(next(ki), (1, mid_ch)),
        "res": [],
        "out_w": nrm(next(ki), (mid_ch, out_ch)),
        "out_b": nrm(next(ki), (1, out_ch)),
    }
    for _ in range(n_resblock):
        params["res"].append({
            "w1": nrm(next(ki), (ksize, mid_ch, mid_ch)),
            "b1": nrm(next(ki), (1, mid_ch)),
            "w2": nrm(next(ki), (ksize, mid_ch, mid_ch)),
            "b2": nrm(next(ki), (1, mid_ch)),
        })
    return params


# ----------------------------------------------------------------------------
# Pure-JAX f32 reference (mirrors the PyTorch module exactly)
# ----------------------------------------------------------------------------
def _ref_conv1d(x_ntc, w_kio, b):
    K = w_kio.shape[0]
    pad = K // 2
    T = x_ntc.shape[1]
    xpad = jnp.pad(x_ntc, ((0, 0), (pad, pad), (0, 0)))
    out = b[None]
    for k in range(K):
        out = out + jnp.einsum("nti,io->nto", xpad[:, k:k + T], w_kio[k])
    return out


def scyclone_g_reference(x_nct, params):
    x = jnp.transpose(x_nct, (0, 2, 1))
    x = _lrelu(jnp.einsum("nti,io->nto", x, params["in_w"]) + params["in_b"][None])
    for blk in params["res"]:
        h = _lrelu(_ref_conv1d(x, blk["w1"], blk["b1"]))
        x = x + _ref_conv1d(h, blk["w2"], blk["b2"])
    x = _lrelu(jnp.einsum("nti,io->nto", x, params["out_w"]) + params["out_b"][None])
    return jnp.transpose(x, (0, 2, 1))


if __name__ == "__main__":
    # Small shapes consistent with the module (Conv1d generator over N, C, T).
    N, IN_CH, MID_CH, OUT_CH, T = 2, 32, 64, 32, 16
    N_RESBLOCK, KSIZE = 3, 5

    key = jax.random.PRNGKey(0)
    pkey, xkey = jax.random.split(key)
    params = init_params(pkey, IN_CH, MID_CH, OUT_CH, N_RESBLOCK, KSIZE)
    x = jax.random.normal(xkey, (N, IN_CH, T), dtype=jnp.float32)

    ref = jax.block_until_ready(scyclone_g_reference(x, params))

    # Exact-precision path (f32 MXU operands + f32 scratch): tight tolerance.
    out_f32 = jax.block_until_ready(
        scyclone_g_forward(x, params, compute_dtype=jnp.float32))
    assert out_f32.shape == (N, OUT_CH, T), out_f32.shape
    assert jnp.allclose(out_f32, ref, atol=1e-4, rtol=1e-4), "f32 mismatch vs reference"

    # Performance path (bf16 MXU operands/scratch, f32 accumulation): loose tol.
    out_bf16 = jax.block_until_ready(
        scyclone_g_forward(x, params, compute_dtype=jnp.bfloat16))
    assert out_bf16.shape == (N, OUT_CH, T), out_bf16.shape
    assert jnp.allclose(out_bf16, ref, atol=5e-2, rtol=5e-2), "bf16 mismatch vs reference"

    print("KERNEL_OK")
</pallas_src>

<mosaic_0001>
module attributes {stable_mosaic.version = 11 : i64} {
  func.func @scyclone_g_kernel(%arg0: memref<36x32xf32, #tpu.memory_space<vmem>>, %arg1: memref<32x128xf32, #tpu.memory_space<vmem>>, %arg2: memref<1x128xf32, #tpu.memory_space<vmem>>, %arg3: memref<15x128x128xf32, #tpu.memory_space<vmem>>, %arg4: memref<3x1x128xf32, #tpu.memory_space<vmem>>, %arg5: memref<15x128x128xf32, #tpu.memory_space<vmem>>, %arg6: memref<3x1x128xf32, #tpu.memory_space<vmem>>, %arg7: memref<128x128xf32, #tpu.memory_space<vmem>>, %arg8: memref<1x128xf32, #tpu.memory_space<vmem>>, %arg9: memref<36x128xf32, #tpu.memory_space<vmem>>, %arg10: memref<40x128xf32, #tpu.memory_space<vmem>>, %arg11: memref<36x128xf32, #tpu.memory_space<vmem>>) attributes {dimension_semantics = [], scalar_prefetch = 0 : i64, scratch_operands = 2 : i64, tpu.core_type = #tpu.core_type<tc>} {
    %cst = arith.constant 0.000000e+00 : f32
    %0 = vector.broadcast %cst : f32 to vector<40x128xf32>
    %c0 = arith.constant 0 : index
    %c0_0 = arith.constant 0 : index
    %1 = vector.load %arg10[%c0, %c0_0] : memref<40x128xf32, #tpu.memory_space<vmem>>, vector<40x128xf32>
    tpu.vector_store %arg10[%c0, %c0_0], %0 {strides = array<i32>} : memref<40x128xf32, #tpu.memory_space<vmem>>, vector<40x128xf32>,
    %c0_1 = arith.constant 0 : index
    %c0_2 = arith.constant 0 : index
    %2 = vector.load %arg0[%c0_1, %c0_2] : memref<36x32xf32, #tpu.memory_space<vmem>>, vector<36x32xf32>
    %c0_3 = arith.constant 0 : index
    %c0_4 = arith.constant 0 : index
    %3 = vector.load %arg1[%c0_3, %c0_4] : memref<32x128xf32, #tpu.memory_space<vmem>>, vector<32x128xf32>
    %cst_5 = arith.constant dense<0.000000e+00> : vector<36x128xf32>
    %4 = tpu.matmul %2, %3, %cst_5 {dimension_numbers = #tpu.dot_dimension_numbers<[1], [0], [0], [1], [0, 0, 1, 1], [], []>} : vector<36x32xf32>, vector<32x128xf32>, vector<36x128xf32> -> vector<36x128xf32>
    %c0_6 = arith.constant 0 : index
    %c0_7 = arith.constant 0 : index
    %5 = vector.load %arg2[%c0_6, %c0_7] : memref<1x128xf32, #tpu.memory_space<vmem>>, vector<1x128xf32>
    %6 = vector.broadcast %5 : vector<1x128xf32> to vector<36x128xf32>
    %7 = arith.addf %4, %6 : vector<36x128xf32>
    %cst_8 = arith.constant 0.000000e+00 : f32
    %8 = vector.broadcast %cst_8 : f32 to vector<36x128xf32>
    %9 = arith.cmpf oge, %7, %8 : vector<36x128xf32>
    %cst_9 = arith.constant 0.00999999977 : f32
    %10 = vector.broadcast %cst_9 : f32 to vector<36x128xf32>
    %11 = arith.mulf %10, %7 : vector<36x128xf32>
    %12 = arith.select %9, %7, %11 : vector<36x128xi1>, vector<36x128xf32>
    %c0_10 = arith.constant 0 : index
    %c0_11 = arith.constant 0 : index
    %13 = vector.load %arg11[%c0_10, %c0_11] : memref<36x128xf32, #tpu.memory_space<vmem>>, vector<36x128xf32>
    tpu.vector_store %arg11[%c0_10, %c0_11], %12 {strides = array<i32>} : memref<36x128xf32, #tpu.memory_space<vmem>>, vector<36x128xf32>,
    %c0_i32 = arith.constant 0 : i32
    %c3_i32 = arith.constant 3 : i32
    %14 = arith.addi %c0_i32, %c3_i32 : i32
    %c1_i32 = arith.constant 1 : i32
    scf.for %arg12 = %c0_i32 to %14 step %c1_i32  : i32 {
      %c1_i32_24 = arith.constant 1 : i32
      %27 = arith.muli %arg12, %c1_i32_24 : i32
      %c0_i32_25 = arith.constant 0 : i32
      %28 = arith.addi %c0_i32_25, %27 : i32
      %c0_26 = arith.constant 0 : index
      %c0_27 = arith.constant 0 : index
      %29 = vector.load %arg11[%c0_26, %c0_27] : memref<36x128xf32, #tpu.memory_space<vmem>>, vector<36x128xf32>
      %c2 = arith.constant 2 : index
      %c0_28 = arith.constant 0 : index
      %30 = vector.load %arg10[%c2, %c0_28] : memref<40x128xf32, #tpu.memory_space<vmem>>, vector<36x128xf32>
      tpu.vector_store %arg10[%c2, %c0_28], %29 {strides = array<i32>} : memref<40x128xf32, #tpu.memory_space<vmem>>, vector<36x128xf32>,
      %cst_29 = arith.constant 0.000000e+00 : f32
      %31 = vector.broadcast %cst_29 : f32 to vector<4x128xf32>
      %c18 = arith.constant 18 : index
      %c0_30 = arith.constant 0 : index
      %32 = vector.load %arg10[%c18, %c0_30] : memref<40x128xf32, #tpu.memory_space<vmem>>, vector<4x128xf32>
      tpu.vector_store %arg10[%c18, %c0_30], %31 {strides = array<i32>} : memref<40x128xf32, #tpu.memory_space<vmem>>, vector<4x128xf32>,
      %33 = arith.index_cast %28 : i32 to index
      %c0_31 = arith.constant 0 : index
      %c0_32 = arith.constant 0 : index
      %34 = vector.load %arg4[%33, %c0_31, %c0_32] : memref<3x1x128xf32, #tpu.memory_space<vmem>>, vector<1x1x128xf32>
      %35 = vector.shape_cast %34 : vector<1x1x128xf32> to vector<1x128xf32>
      %c0_33 = arith.constant 0 : index
      %c0_34 = arith.constant 0 : index
      %36 = vector.load %arg10[%c0_33, %c0_34] : memref<40x128xf32, #tpu.memory_space<vmem>>, vector<36x128xf32>
      %c5_i32 = arith.constant 5 : i32
      %37 = arith.muli %28, %c5_i32 : i32
      %38 = arith.index_cast %37 : i32 to index
      %c0_35 = arith.constant 0 : index
      %c0_36 = arith.constant 0 : index
      %39 = vector.load %arg3[%38, %c0_35, %c0_36] : memref<15x128x128xf32, #tpu.memory_space<vmem>>, vector<1x128x128xf32>
      %40 = vector.shape_cast %39 : vector<1x128x128xf32> to vector<128x128xf32>
      %cst_37 = arith.constant dense<0.000000e+00> : vector<36x128xf32>
      %41 = tpu.matmul %36, %40, %cst_37 {dimension_numbers = #tpu.dot_dimension_numbers<[1], [0], [0], [1], [0, 0, 1, 1], [], []>} : vector<36x128xf32>, vector<128x128xf32>, vector<36x128xf32> -> vector<36x128xf32>
      %c1 = arith.constant 1 : index
      %c0_38 = arith.constant 0 : index
      %42 = vector.load %arg10[%c1, %c0_38] : memref<40x128xf32, #tpu.memory_space<vmem>>, vector<36x128xf32>
      %c5_i32_39 = arith.constant 5 : i32
      %43 = arith.muli %28, %c5_i32_39 : i32
      %c1_i32_40 = arith.constant 1 : i32
      %44 = arith.addi %43, %c1_i32_40 : i32
      %45 = arith.index_cast %44 : i32 to index
      %c0_41 = arith.constant 0 : index
      %c0_42 = arith.constant 0 : index
      %46 = vector.load %arg3[%45, %c0_41, %c0_42] : memref<15x128x128xf32, #tpu.memory_space<vmem>>, vector<1x128x128xf32>
      %47 = vector.shape_cast %46 : vector<1x128x128xf32> to vector<128x128xf32>
      %cst_43 = arith.constant dense<0.000000e+00> : vector<36x128xf32>
      %48 = tpu.matmul %42, %47, %cst_43 {dimension_numbers = #tpu.dot_dimension_numbers<[1], [0], [0], [1], [0, 0, 1, 1], [], []>} : vector<36x128xf32>, vector<128x128xf32>, vector<36x128xf32> -> vector<36x128xf32>
      %49 = arith.addf %41, %48 : vector<36x128xf32>
      %c2_44 = arith.constant 2 : index
      %c0_45 = arith.constant 0 : index
      %50 = vector.load %arg10[%c2_44, %c0_45] : memref<40x128xf32, #tpu.memory_space<vmem>>, vector<36x128xf32>
      %c5_i32_46 = arith.constant 5 : i32
      %51 = arith.muli %28, %c5_i32_46 : i32
      %c2_i32 = arith.constant 2 : i32
      %52 = arith.addi %51, %c2_i32 : i32
      %53 = arith.index_cast %52 : i32 to index
      %c0_47 = arith.constant 0 : index
      %c0_48 = arith.constant 0 : index
      %54 = vector.load %arg3[%53, %c0_47, %c0_48] : memref<15x128x128xf32, #tpu.memory_space<vmem>>, vector<1x128x128xf32>
      %55 = vector.shape_cast %54 : vector<1x128x128xf32> to vector<128x128xf32>
      %cst_49 = arith.constant dense<0.000000e+00> : vector<36x128xf32>
      %56 = tpu.matmul %50, %55, %cst_49 {dimension_numbers = #tpu.dot_dimension_numbers<[1], [0], [0], [1], [0, 0, 1, 1], [], []>} : vector<36x128xf32>, vector<128x128xf32>, vector<36x128xf32> -> vector<36x128xf32>
      %57 = arith.addf %49, %56 : vector<36x128xf32>
      %c3 = arith.constant 3 : index
      %c0_50 = arith.constant 0 : index
      %58 = vector.load %arg10[%c3, %c0_50] : memref<40x128xf32, #tpu.memory_space<vmem>>, vector<36x128xf32>
      %c5_i32_51 = arith.constant 5 : i32
      %59 = arith.muli %28, %c5_i32_51 : i32
      %c3_i32_52 = arith.constant 3 : i32
      %60 = arith.addi %59, %c3_i32_52 : i32
      %61 = arith.index_cast %60 : i32 to index
      %c0_53 = arith.constant 0 : index
      %c0_54 = arith.constant 0 : index
      %62 = vector.load %arg3[%61, %c0_53, %c0_54] : memref<15x128x128xf32, #tpu.memory_space<vmem>>, vector<1x128x128xf32>
      %63 = vector.shape_cast %62 : vector<1x128x128xf32> to vector<128x128xf32>
      %cst_55 = arith.constant dense<0.000000e+00> : vector<36x128xf32>
      %64 = tpu.matmul %58, %63, %cst_55 {dimension_numbers = #tpu.dot_dimension_numbers<[1], [0], [0], [1], [0, 0, 1, 1], [], []>} : vector<36x128xf32>, vector<128x128xf32>, vector<36x128xf32> -> vector<36x128xf32>
      %65 = arith.addf %57, %64 : vector<36x128xf32>
      %c4 = arith.constant 4 : index
      %c0_56 = arith.constant 0 : index
      %66 = vector.load %arg10[%c4, %c0_56] : memref<40x128xf32, #tpu.memory_space<vmem>>, vector<36x128xf32>
      %c5_i32_57 = arith.constant 5 : i32
      %67 = arith.muli %28, %c5_i32_57 : i32
      %c4_i32 = arith.constant 4 : i32
      %68 = arith.addi %67, %c4_i32 : i32
      %69 = arith.index_cast %68 : i32 to index
      %c0_58 = arith.constant 0 : index
      %c0_59 = arith.constant 0 : index
      %70 = vector.load %arg3[%69, %c0_58, %c0_59] : memref<15x128x128xf32, #tpu.memory_space<vmem>>, vector<1x128x128xf32>
      %71 = vector.shape_cast %70 : vector<1x128x128xf32> to vector<128x128xf32>
      %cst_60 = arith.constant dense<0.000000e+00> : vector<36x128xf32>
      %72 = tpu.matmul %66, %71, %cst_60 {dimension_numbers = #tpu.dot_dimension_numbers<[1], [0], [0], [1], [0, 0, 1, 1], [], []>} : vector<36x128xf32>, vector<128x128xf32>, vector<36x128xf32> -> vector<36x128xf32>
      %73 = arith.addf %65, %72 : vector<36x128xf32>
      %74 = vector.broadcast %35 : vector<1x128xf32> to vector<36x128xf32>
      %75 = arith.addf %73, %74 : vector<36x128xf32>
      %cst_61 = arith.constant 0.000000e+00 : f32
      %76 = vector.broadcast %cst_61 : f32 to vector<36x128xf32>
      %77 = arith.cmpf oge, %75, %76 : vector<36x128xf32>
      %cst_62 = arith.constant 0.00999999977 : f32
      %78 = vector.broadcast %cst_62 : f32 to vector<36x128xf32>
      %79 = arith.mulf %78, %75 : vector<36x128xf32>
      %80 = arith.select %77, %75, %79 : vector<36x128xi1>, vector<36x128xf32>
      %c2_63 = arith.constant 2 : index
      %c0_64 = arith.constant 0 : index
      %81 = vector.load %arg10[%c2_63, %c0_64] : memref<40x128xf32, #tpu.memory_space<vmem>>, vector<36x128xf32>
      tpu.vector_store %arg10[%c2_63, %c0_64], %80 {strides = array<i32>} : memref<40x128xf32, #tpu.memory_space<vmem>>, vector<36x128xf32>,
      %cst_65 = arith.constant 0.000000e+00 : f32
      %82 = vector.broadcast %cst_65 : f32 to vector<4x128xf32>
      %c18_66 = arith.constant 18 : index
      %c0_67 = arith.constant 0 : index
      %83 = vector.load %arg10[%c18_66, %c0_67] : memref<40x128xf32, #tpu.memory_space<vmem>>, vector<4x128xf32>
      tpu.vector_store %arg10[%c18_66, %c0_67], %82 {strides = array<i32>} : memref<40x128xf32, #tpu.memory_space<vmem>>, vector<4x128xf32>,
      %c0_68 = arith.constant 0 : index
      %c0_69 = arith.constant 0 : index
      %84 = vector.load %arg11[%c0_68, %c0_69] : memref<36x128xf32, #tpu.memory_space<vmem>>, vector<36x128xf32>
      %85 = arith.index_cast %28 : i32 to index
      %c0_70 = arith.constant 0 : index
      %c0_71 = arith.constant 0 : index
      %86 = vector.load %arg6[%85, %c0_70, %c0_71] : memref<3x1x128xf32, #tpu.memory_space<vmem>>, vector<1x1x128xf32>
      %87 = vector.shape_cast %86 : vector<1x1x128xf32> to vector<1x128xf32>
      %c0_72 = arith.constant 0 : index
      %c0_73 = arith.constant 0 : index
      %88 = vector.load %arg10[%c0_72, %c0_73] : memref<40x128xf32, #tpu.memory_space<vmem>>, vector<36x128xf32>
      %c5_i32_74 = arith.constant 5 : i32
      %89 = arith.muli %28, %c5_i32_74 : i32
      %90 = arith.index_cast %89 : i32 to index
      %c0_75 = arith.constant 0 : index
      %c0_76 = arith.constant 0 : index
      %91 = vector.load %arg5[%90, %c0_75, %c0_76] : memref<15x128x128xf32, #tpu.memory_space<vmem>>, vector<1x128x128xf32>
      %92 = vector.shape_cast %91 : vector<1x128x128xf32> to vector<128x128xf32>
      %cst_77 = arith.constant dense<0.000000e+00> : vector<36x128xf32>
      %93 = tpu.matmul %88, %92, %cst_77 {dimension_numbers = #tpu.dot_dimension_numbers<[1], [0], [0], [1], [0, 0, 1, 1], [], []>} : vector<36x128xf32>, vector<128x128xf32>, vector<36x128xf32> -> vector<36x128xf32>
      %c1_78 = arith.constant 1 : index
      %c0_79 = arith.constant 0 : index
      %94 = vector.load %arg10[%c1_78, %c0_79] : memref<40x128xf32, #tpu.memory_space<vmem>>, vector<36x128xf32>
      %c5_i32_80 = arith.constant 5 : i32
      %95 = arith.muli %28, %c5_i32_80 : i32
      %c1_i32_81 = arith.constant 1 : i32
      %96 = arith.addi %95, %c1_i32_81 : i32
      %97 = arith.index_cast %96 : i32 to index
      %c0_82 = arith.constant 0 : index
      %c0_83 = arith.constant 0 : index
      %98 = vector.load %arg5[%97, %c0_82, %c0_83] : memref<15x128x128xf32, #tpu.memory_space<vmem>>, vector<1x128x128xf32>
      %99 = vector.shape_cast %98 : vector<1x128x128xf32> to vector<128x128xf32>
      %cst_84 = arith.constant dense<0.000000e+00> : vector<36x128xf32>
      %100 = tpu.matmul %94, %99, %cst_84 {dimension_numbers = #tpu.dot_dimension_numbers<[1], [0], [0], [1], [0, 0, 1, 1], [], []>} : vector<36x128xf32>, vector<128x128xf32>, vector<36x128xf32> -> vector<36x128xf32>
      %101 = arith.addf %93, %100 : vector<36x128xf32>
      %c2_85 = arith.constant 2 : index
      %c0_86 = arith.constant 0 : index
      %102 = vector.load %arg10[%c2_85, %c0_86] : memref<40x128xf32, #tpu.memory_space<vmem>>, vector<36x128xf32>
      %c5_i32_87 = arith.constant 5 : i32
      %103 = arith.muli %28, %c5_i32_87 : i32
      %c2_i32_88 = arith.constant 2 : i32
      %104 = arith.addi %103, %c2_i32_88 : i32
      %105 = arith.index_cast %104 : i32 to index
      %c0_89 = arith.constant 0 : index
      %c0_90 = arith.constant 0 : index
      %106 = vector.load %arg5[%105, %c0_89, %c0_90] : memref<15x128x128xf32, #tpu.memory_space<vmem>>, vector<1x128x128xf32>
      %107 = vector.shape_cast %106 : vector<1x128x128xf32> to vector<128x128xf32>
      %cst_91 = arith.constant dense<0.000000e+00> : vector<36x128xf32>
      %108 = tpu.matmul %102, %107, %cst_91 {dimension_numbers = #tpu.dot_dimension_numbers<[1], [0], [0], [1], [0, 0, 1, 1], [], []>} : vector<36x128xf32>, vector<128x128xf32>, vector<36x128xf32> -> vector<36x128xf32>
      %109 = arith.addf %101, %108 : vector<36x128xf32>
      %c3_92 = arith.constant 3 : index
      %c0_93 = arith.constant 0 : index
      %110 = vector.load %arg10[%c3_92, %c0_93] : memref<40x128xf32, #tpu.memory_space<vmem>>, vector<36x128xf32>
      %c5_i32_94 = arith.constant 5 : i32
      %111 = arith.muli %28, %c5_i32_94 : i32
      %c3_i32_95 = arith.constant 3 : i32
      %112 = arith.addi %111, %c3_i32_95 : i32
      %113 = arith.index_cast %112 : i32 to index
      %c0_96 = arith.constant 0 : index
      %c0_97 = arith.constant 0 : index
      %114 = vector.load %arg5[%113, %c0_96, %c0_97] : memref<15x128x128xf32, #tpu.memory_space<vmem>>, vector<1x128x128xf32>
      %115 = vector.shape_cast %114 : vector<1x128x128xf32> to vector<128x128xf32>
      %cst_98 = arith.constant dense<0.000000e+00> : vector<36x128xf32>
      %116 = tpu.matmul %110, %115, %cst_98 {dimension_numbers = #tpu.dot_dimension_numbers<[1], [0], [0], [1], [0, 0, 1, 1], [], []>} : vector<36x128xf32>, vector<128x128xf32>, vector<36x128xf32> -> vector<36x128xf32>
      %117 = arith.addf %109, %116 : vector<36x128xf32>
      %c4_99 = arith.constant 4 : index
      %c0_100 = arith.constant 0 : index
      %118 = vector.load %arg10[%c4_99, %c0_100] : memref<40x128xf32, #tpu.memory_space<vmem>>, vector<36x128xf32>
      %c5_i32_101 = arith.constant 5 : i32
      %119 = arith.muli %28, %c5_i32_101 : i32
      %c4_i32_102 = arith.constant 4 : i32
      %120 = arith.addi %119, %c4_i32_102 : i32
      %121 = arith.index_cast %120 : i32 to index
      %c0_103 = arith.constant 0 : index
      %c0_104 = arith.constant 0 : index
      %122 = vector.load %arg5[%121, %c0_103, %c0_104] : memref<15x128x128xf32, #tpu.memory_space<vmem>>, vector<1x128x128xf32>
      %123 = vector.shape_cast %122 : vector<1x128x128xf32> to vector<128x128xf32>
      %cst_105 = arith.constant dense<0.000000e+00> : vector<36x128xf32>
      %124 = tpu.matmul %118, %123, %cst_105 {dimension_numbers = #tpu.dot_dimension_numbers<[1], [0], [0], [1], [0, 0, 1, 1], [], []>} : vector<36x128xf32>, vector<128x128xf32>, vector<36x128xf32> -> vector<36x128xf32>
      %125 = arith.addf %117, %124 : vector<36x128xf32>
      %126 = vector.broadcast %87 : vector<1x128xf32> to vector<36x128xf32>
      %127 = arith.addf %125, %126 : vector<36x128xf32>
      %128 = arith.addf %84, %127 : vector<36x128xf32>
      %c0_106 = arith.constant 0 : index
      %c0_107 = arith.constant 0 : index
      %129 = vector.load %arg11[%c0_106, %c0_107] : memref<36x128xf32, #tpu.memory_space<vmem>>, vector<36x128xf32>
      tpu.vector_store %arg11[%c0_106, %c0_107], %128 {strides = array<i32>} : memref<36x128xf32, #tpu.memory_space<vmem>>, vector<36x128xf32>,
    }
    %c3_i32_12 = arith.constant 3 : i32
    %c0_13 = arith.constant 0 : index
    %c0_14 = arith.constant 0 : index
    %15 = vector.load %arg11[%c0_13, %c0_14] : memref<36x128xf32, #tpu.memory_space<vmem>>, vector<36x128xf32>
    %c0_15 = arith.constant 0 : index
    %c0_16 = arith.constant 0 : index
    %16 = vector.load %arg7[%c0_15, %c0_16] : memref<128x128xf32, #tpu.memory_space<vmem>>, vector<128x128xf32>
    %cst_17 = arith.constant dense<0.000000e+00> : vector<36x128xf32>
    %17 = tpu.matmul %15, %16, %cst_17 {dimension_numbers = #tpu.dot_dimension_numbers<[1], [0], [0], [1], [0, 0, 1, 1], [], []>} : vector<36x128xf32>, vector<128x128xf32>, vector<36x128xf32> -> vector<36x128xf32>
    %c0_18 = arith.constant 0 : index
    %c0_19 = arith.constant 0 : index
    %18 = vector.load %arg8[%c0_18, %c0_19] : memref<1x128xf32, #tpu.memory_space<vmem>>, vector<1x128xf32>
    %19 = vector.broadcast %18 : vector<1x128xf32> to vector<36x128xf32>
    %20 = arith.addf %17, %19 : vector<36x128xf32>
    %cst_20 = arith.constant 0.000000e+00 : f32
    %21 = vector.broadcast %cst_20 : f32 to vector<36x128xf32>
    %22 = arith.cmpf oge, %20, %21 : vector<36x128xf32>
    %cst_21 = arith.constant 0.00999999977 : f32
    %23 = vector.broadcast %cst_21 : f32 to vector<36x128xf32>
    %24 = arith.mulf %23, %20 : vector<36x128xf32>
    %25 = arith.select %22, %20, %24 : vector<36x128xi1>, vector<36x128xf32>
    %c0_22 = arith.constant 0 : index
    %c0_23 = arith.constant 0 : index
    %26 = vector.load %arg9[%c0_22, %c0_23] : memref<36x128xf32, #tpu.memory_space<vmem>>, vector<36x128xf32>
    tpu.vector_store %arg9[%c0_22, %c0_23], %25 {strides = array<i32>} : memref<36x128xf32, #tpu.memory_space<vmem>>, vector<36x128xf32>,
    return
  }
}

</mosaic_0001>

<llo_original>
// kernel: tpu_custom_call.1
$region0: #{tpu_custom_call.1}
  #allocation0 [shape = 'u32[]', space=smem, size = 0x4, offset = 0x4, fixed_abs, tag = 'smem constant byte address 0x4 - core index']
  #allocation1 [shape = 'u32[144,128]{1,0:T(1,128)}', space=vmem, size = 0x12000, scoped, tag = 'internal scratch']
  #allocation2 [shape = 'f32[40,128]{1,0:T(8,128)}', space=vmem, size = 0x5000, scoped, tag = 'scratch operand']
  #allocation3 [shape = 'f32[36,128]{1,0:T(8,128)}', space=vmem, size = 0x5000, scoped, tag = 'scratch operand']
  %s0 = inlined_call_operand.vmem [shape: f32[36,32], index: 0, kind: input, shape index: {}]
  %s1 = inlined_call_operand.vmem [shape: f32[32,128], index: 1, kind: input, shape index: {}]
  %s2 = inlined_call_operand.vmem [shape: f32[1,128], index: 2, kind: input, shape index: {}]
  %s3 = inlined_call_operand.hbm [shape: f32[15,128,128], index: 3, kind: input, shape index: {}]
  %s4 = inlined_call_operand.vmem [shape: f32[3,1,128], index: 4, kind: input, shape index: {}]
  %s5 = inlined_call_operand.hbm [shape: f32[15,128,128], index: 5, kind: input, shape index: {}]
  %s6 = inlined_call_operand.vmem [shape: f32[3,1,128], index: 6, kind: input, shape index: {}]
  %s7 = inlined_call_operand.hbm [shape: f32[128,128], index: 7, kind: input, shape index: {}]
  %s8 = inlined_call_operand.vmem [shape: f32[1,128], index: 8, kind: input, shape index: {}]
  %s9 = inlined_call_operand.hbm [shape: f32[36,128], index: 9, kind: output, shape index: {}]
  %s10 = sld [smem:[#allocation0]]
  $region65: #{tpu_custom_call.1} parent=0
    _
  %s12 = ssub.s32 1, %s10
  %s13 = scalar_select 0, %s12, %s10
  $region1: #{tpu_custom_call.1} parent=0
    #allocation4 [shape = 'u8[983040]{0}', space=vmem, size = 0xf0000, scoped, tag = 'input window, operand 3, single buffered']
    #allocation5 [shape = 's32[1]{0}', space=sflag, size = 0x4, scoped, tag = 'scoped memory for tpu_custom_call.1']
    #allocation6 [shape = 's32[1]{0}', space=sflag, size = 0x4, scoped, tag = 'scoped memory for tpu_custom_call.1']
    #allocation7 [shape = 'u8[983040]{0}', space=vmem, size = 0xf0000, scoped, tag = 'input window, operand 5, single buffered']
    #allocation8 [shape = 's32[1]{0}', space=sflag, size = 0x4, scoped, tag = 'scoped memory for tpu_custom_call.1']
    #allocation9 [shape = 'u8[65536]{0}', space=vmem, size = 0x10000, scoped, tag = 'input window, operand 7, single buffered']
    #allocation10 [shape = 'u8[20480]{0}', space=vmem, size = 0x5000, scoped, tag = 'output window, operand 0, single buffered']
    %14 = vsyncpa [#allocation5], 0
    %15 = vsyncpa [#allocation8], 0
    %16 = vsyncpa [#allocation6], 0
    // Predicated region
    $region2: #{tpu_custom_call.1} parent=1 // pred_check
      _
    $region3: #{tpu_custom_call.1} parent=1 // pred_check_branch
      %18 = sbr.rel (0) target = $region5
    $region4: #{tpu_custom_call.1} parent=1 // pred_region
      _
    $region5: #{tpu_custom_call.1} parent=1 // pred_fallthru
      _
    // Predicated region
    $region6: #{tpu_custom_call.1} parent=1 // pred_check
      _
    $region7: #{tpu_custom_call.1} parent=1 // pred_check_branch
      %20 = sbr.rel (0) target = $region9
    $region8: #{tpu_custom_call.1} parent=1 // pred_region
      _
    $region9: #{tpu_custom_call.1} parent=1 // pred_fallthru
      _
    // Predicated region
    $region10: #{tpu_custom_call.1} parent=1 // pred_check
      _
    $region11: #{tpu_custom_call.1} parent=1 // pred_check_branch
      %22 = sbr.rel (0) target = $region13
    $region12: #{tpu_custom_call.1} parent=1 // pred_region
      _
    $region13: #{tpu_custom_call.1} parent=1 // pred_fallthru
      _
    // Predicated region
    $region14: #{tpu_custom_call.1} parent=1 // pred_check
      _
    $region15: #{tpu_custom_call.1} parent=1 // pred_check_branch
      %24 = sbr.rel (0) target = $region17
    $region16: #{tpu_custom_call.1} parent=1 // pred_region
      %s26 = ssub.s32 30720, 30720
      %27 = vsyncadd [#allocation5], %s26
      %s28 = sshll.u32 [#allocation4], 4
      %s29 = int_to_ptr.vmem [resolvable:$true] %s28
      %34 = dma.hbm_to_vmem [thread:$0]  %s3, 30720, %s29, [#allocation5], 128, 128, 8
    $region17: #{tpu_custom_call.1} parent=1 // pred_fallthru
      _
    // Predicated region
    $region18: #{tpu_custom_call.1} parent=1 // pred_check
      _
    $region19: #{tpu_custom_call.1} parent=1 // pred_check_branch
      %36 = sbr.rel (0) target = $region21
    $region20: #{tpu_custom_call.1} parent=1 // pred_region
      _
    $region21: #{tpu_custom_call.1} parent=1 // pred_fallthru
      _
    // Predicated region
    $region22: #{tpu_custom_call.1} parent=1 // pred_check
      _
    $region23: #{tpu_custom_call.1} parent=1 // pred_check_branch
      %38 = sbr.rel (0) target = $region25
    $region24: #{tpu_custom_call.1} parent=1 // pred_region
      %s40 = ssub.s32 30720, 30720
      %41 = vsyncadd [#allocation8], %s40
      %s42 = sshll.u32 [#allocation7], 4
      %s43 = int_to_ptr.vmem [resolvable:$true] %s42
      %48 = dma.hbm_to_vmem [thread:$0]  %s5, 30720, %s43, [#allocation8], 128, 128, 8
    $region25: #{tpu_custom_call.1} parent=1 // pred_fallthru
      _
    // Predicated region
    $region26: #{tpu_custom_call.1} parent=1 // pred_check
      _
    $region27: #{tpu_custom_call.1} parent=1 // pred_check_branch
      %50 = sbr.rel (0) target = $region29
    $region28: #{tpu_custom_call.1} parent=1 // pred_region
      _
    $region29: #{tpu_custom_call.1} parent=1 // pred_fallthru
      _
    // Predicated region
    $region30: #{tpu_custom_call.1} parent=1 // pred_check
      _
    $region31: #{tpu_custom_call.1} parent=1 // pred_check_branch
      %52 = sbr.rel (0) target = $region33
    $region32: #{tpu_custom_call.1} parent=1 // pred_region
      %s54 = ssub.s32 2048, 2048
      %55 = vsyncadd [#allocation8], %s54
      %s56 = sshll.u32 [#allocation9], 4
      %s57 = int_to_ptr.vmem [resolvable:$true] %s56
      %62 = dma.hbm_to_vmem [thread:$0]  %s7, 2048, %s57, [#allocation8], 128, 128, 8
    $region33: #{tpu_custom_call.1} parent=1 // pred_fallthru
      _
    // Predicated region
    $region34: #{tpu_custom_call.1} parent=1 // pred_check
      _
    $region35: #{tpu_custom_call.1} parent=1 // pred_check_branch
      %64 = sbr.rel (0) target = $region37
    $region36: #{tpu_custom_call.1} parent=1 // pred_region
      _
    $region37: #{tpu_custom_call.1} parent=1 // pred_fallthru
      _
    // Predicated region
    $region38: #{tpu_custom_call.1} parent=1 // pred_check
      _
    $region39: #{tpu_custom_call.1} parent=1 // pred_check_branch
      %66 = sbr.rel (0) target = $region41
    $region40: #{tpu_custom_call.1} parent=1 // pred_region
      %67 = dma.done [#allocation5], 30720
    $region41: #{tpu_custom_call.1} parent=1 // pred_fallthru
      _
    // Predicated region
    $region42: #{tpu_custom_call.1} parent=1 // pred_check
      _
    $region43: #{tpu_custom_call.1} parent=1 // pred_check_branch
      %69 = sbr.rel (0) target = $region45
    $region44: #{tpu_custom_call.1} parent=1 // pred_region
      %70 = dma.done [#allocation8], 30720
    $region45: #{tpu_custom_call.1} parent=1 // pred_fallthru
      _
    // Predicated region
    $region46: #{tpu_custom_call.1} parent=1 // pred_check
      _
    $region47: #{tpu_custom_call.1} parent=1 // pred_check_branch
      %72 = sbr.rel (0) target = $region49
    $region48: #{tpu_custom_call.1} parent=1 // pred_region
      %73 = dma.done [#allocation8], 2048
    $region49: #{tpu_custom_call.1} parent=1 // pred_fallthru
      _
    %74 = vst [vmem:[#allocation2] sm:$0xff] 0.0
    %75 = vst [vmem:[#allocation2 + $0x8] sm:$0xff] 0.0
    %76 = vst [vmem:[#allocation2 + $0x10] sm:$0xff] 0.0
    %77 = vst [vmem:[#allocation2 + $0x18] sm:$0xff] 0.0
    %78 = vst [vmem:[#allocation2 + $0x20] sm:$0xff] 0.0
    %v79 = vld [vmem:[%s0] sm:$0xff]
    %v80 = vld [vmem:[%s0 + $0x8] sm:$0xff]
    %v81 = vld [vmem:[%s0 + $0x10] sm:$0xff]
    %v82 = vld [vmem:[%s0 + $0x18] sm:$0xff]
    %v83 = vld [vmem:[%s0 + $0x20] sm:$0xf]
    %v84 = vld [vmem:[%s1] sm:$0xff]
    %v85 = vld [vmem:[%s1 + $0x8] sm:$0xff]
    %v86 = vld [vmem:[%s1 + $0x10] sm:$0xff]
    %v87 = vld [vmem:[%s1 + $0x18] sm:$0xff]
    %v88 = vld [vmem:[%s2] sm:$0x1]
    %v90 = vlaneseq
    %v91 = vshrl.u32 %v90, 7
    %v92 = vsub.s32 0, %v91
    %v93 = vrot.slane %v88, %v92
    %vm95 = vcmask 261120
    %v97 = vsel %vm95, %v79, 0
    %v100 = vsel %vm95, %v80, 0
    %v103 = vsel %vm95, %v81, 0
    %v106 = vsel %vm95, %v82, 0
    %v109 = vsel %vm95, %v83, 0
    %111 = vmatprep.subr.mxu0 0.0
    %112 = vmatpush1.msra.mxu0 0.0
    %113 = vmatprep.subr.mxu0 0.0
    %114 = vmatpush1.msra.mxu0 0.0
    %115 = vmatprep.subr.mxu0 0.0
    %116 = vmatpush1.msra.mxu0 0.0
    %117 = vmatprep.subr.mxu0 0.0
    %118 = vmatpush1.msra.mxu0 0.0
    %119 = vmatprep.subr.mxu0 0.0
    %120 = vmatpush1.msra.mxu0 0.0
    %121 = vmatprep.subr.mxu0 0.0
    %122 = vmatpush1.msra.mxu0 0.0
    %123 = vmatprep.subr.mxu0 0.0
    %124 = vmatpush1.msra.mxu0 0.0
    %125 = vmatprep.subr.mxu0 0.0
    %126 = vmatpush1.msra.mxu0 0.0
    %127 = vmatprep.subr.mxu0 0.0
    %128 = vmatpush1.msra.mxu0 0.0
    %129 = vmatprep.subr.mxu0 0.0
    %130 = vmatpush1.msra.mxu0 0.0
    %131 = vmatprep.subr.mxu0 0.0
    %132 = vmatpush1.msra.mxu0 0.0
    %133 = vmatprep.subr.mxu0 0.0
    %134 = vmatpush1.msra.mxu0 0.0
    %135 = vmatprep.subr.mxu0 0.0
    %136 = vmatpush1.msra.mxu0 %v87
    %137 = vmatprep.subr.mxu0 0.0
    %138 = vmatpush1.msra.mxu0 %v86
    %139 = vmatprep.subr.mxu0 0.0
    %140 = vmatpush1.msra.mxu0 %v85
    %141 = vmatprep.subr.mxu0 0.0
    %142 = vmatpush1.msra.mxu0 %v84
    %143 = vmatprep.subr.mxu0 0.0
    %144 = vmatpush2.msra.mxu0 0.0
    %145 = vmatprep.subr.mxu0 0.0
    %146 = vmatpush2.msra.mxu0 0.0
    %147 = vmatprep.subr.mxu0 0.0
    %148 = vmatpush2.msra.mxu0 0.0
    %149 = vmatprep.subr.mxu0 0.0
    %150 = vmatpush2.msra.mxu0 0.0
    %151 = vmatprep.subr.mxu0 0.0
    %152 = vmatpush2.msra.mxu0 0.0
    %153 = vmatprep.subr.mxu0 0.0
    %154 = vmatpush2.msra.mxu0 0.0
    %155 = vmatprep.subr.mxu0 0.0
    %156 = vmatpush2.msra.mxu0 0.0
    %157 = vmatprep.subr.mxu0 0.0
    %158 = vmatpush2.msra.mxu0 0.0
    %159 = vmatprep.subr.mxu0 0.0
    %160 = vmatpush2.msra.mxu0 0.0
    %161 = vmatprep.subr.mxu0 0.0
    %162 = vmatpush2.msra.mxu0 0.0
    %163 = vmatprep.subr.mxu0 0.0
    %164 = vmatpush2.msra.mxu0 0.0
    %165 = vmatprep.subr.mxu0 0.0
    %166 = vmatpush2.msra.mxu0 0.0
    %167 = vmatprep.subr.mxu0 0.0
    %168 = vmatpush2.msra.mxu0 0.0
    %169 = vmatprep.subr.mxu0 0.0
    %170 = vmatpush2.msra.mxu0 0.0
    %171 = vmatprep.subr.mxu0 0.0
    %172 = vmatpush2.msra.mxu0 0.0
    %173 = vmatprep.subr.mxu0 0.0
    %174 = vmatpush2.msra.mxu0 0.0
    %175 = vmatprep.mubr.f32.mxu0 0.0
    %176 = vmatmul.mubr.f32.gmra.mxu0 %v97
    %v177 = vpop.f32.mrf.mxu0
    %v178 = vadd.f32 %v93, %v177
    %v179 = vpop.f32.mrf.mxu0
    %180 = vmatprep.mubr.f32.mxu0 0.0
    %181 = vmatmul.mubr.f32.gmra.mxu0 %v100
    %v182 = vpop.f32.mrf.mxu0
    %v183 = vadd.f32 %v93, %v182
    %v184 = vpop.f32.mrf.mxu0
    %185 = vmatprep.mubr.f32.mxu0 0.0
    %186 = vmatmul.mubr.f32.gmra.mxu0 %v103
    %v187 = vpop.f32.mrf.mxu0
    %v188 = vadd.f32 %v93, %v187
    %v189 = vpop.f32.mrf.mxu0
    %190 = vmatprep.mubr.f32.mxu0 0.0
    %191 = vmatmul.mubr.f32.gmra.mxu0 %v106
    %v192 = vpop.f32.mrf.mxu0
    %v193 = vadd.f32 %v93, %v192
    %v194 = vpop.f32.mrf.mxu0
    %195 = vmatprep.mubr.f32.mxu0 0.0
    %196 = vmatmul.mubr.f32.gmra.mxu0 %v109
    %v197 = vpop.f32.mrf.mxu0
    %v198 = vadd.f32 %v93, %v197
    %v199 = vpop.f32.mrf.mxu0
    %200 = vdwg.mxu0
    %vm201 = vcmp.ge.f32.partialorder %v178, 0.0
    %vm202 = vcmp.ge.f32.partialorder %v183, 0.0
    %vm203 = vcmp.ge.f32.partialorder %v188, 0.0
    %vm204 = vcmp.ge.f32.partialorder %v193, 0.0
    %vm205 = vcmp.ge.f32.partialorder %v198, 0.0
    %v206 = vmul.f32 %v178, 0.01
    %v207 = vmul.f32 %v183, 0.01
    %v208 = vmul.f32 %v188, 0.01
    %v209 = vmul.f32 %v193, 0.01
    %v210 = vmul.f32 %v198, 0.01
    %v211 = vsel %vm201, %v178, %v206
    %v212 = vsel %vm202, %v183, %v207
    %v213 = vsel %vm203, %v188, %v208
    %v214 = vsel %vm204, %v193, %v209
    %v215 = vsel %vm205, %v198, %v210
    %216 = vst [vmem:[#allocation3] sm:$0xff] %v211
    %217 = vst [vmem:[#allocation3 + $0x8] sm:$0xff] %v212
    %218 = vst [vmem:[#allocation3 + $0x10] sm:$0xff] %v213
    %219 = vst [vmem:[#allocation3 + $0x18] sm:$0xff] %v214
    %220 = vst [vmem:[#allocation3 + $0x20] sm:$0xf] %v215
    loop: start=0, step=1, limit=3
    $region50: #{tpu_custom_call.1} parent=1 // loop_pre_header
      _
    $region51: #{tpu_custom_call.1} parent=1 // loop_header
      %s222 = sphi 0, %s226
      %p223 = scmp.ge.s32.totalorder %s222, 3
    $region52: #{tpu_custom_call.1} parent=1 // loop_header_branch
      %225 = sbr.rel (%p223) target = $region56
    $region53: #{tpu_custom_call.1} parent=1 // loop_body
      %v227 = vld [vmem:[#allocation3] sm:$0xff]
      %v228 = vld [vmem:[#allocation3 + $0x8] sm:$0xff]
      %v229 = vld [vmem:[#allocation3 + $0x10] sm:$0xff]
      %v230 = vld [vmem:[#allocation3 + $0x18] sm:$0xff]
      %v231 = vld [vmem:[#allocation3 + $0x20] sm:$0xf]
      %232 = vst [vmem:[#allocation2 + $0x2] sm:$0xff] %v227
      %233 = vst [vmem:[#allocation2 + $0xa] sm:$0xff] %v228
      %234 = vst [vmem:[#allocation2 + $0x12] sm:$0xff] %v229
      %235 = vst [vmem:[#allocation2 + $0x1a] sm:$0xff] %v230
      %236 = vst [vmem:[#allocation2 + $0x22] sm:$0xf] %v231
      %237 = vst [vmem:[#allocation2 + $0x12] sm:$0xf] 0.0
      %s238 = scalar_lea.vmem %s4, %s222
      %v239 = vld [vmem:[%s238] sm:$0x1]
      %v240 = vld [vmem:[#allocation2] sm:$0xff]
      %v241 = vld [vmem:[#allocation2 + $0x8] sm:$0xff]
      %v242 = vld [vmem:[#allocation2 + $0x10] sm:$0xff]
      %v243 = vld [vmem:[#allocation2 + $0x18] sm:$0xff]
      %v244 = vld [vmem:[#allocation2 + $0x20] sm:$0xf]
      %s245 = smul.u32 %s222, 5
      %s246 = smul.u32 %s245, 128
      %s247 = scalar_lea.vmem [#allocation4], %s246
      %v248 = vld [vmem:[%s247] sm:$0xff]
      %v249 = vld [vmem:[%s247 + $0x8] sm:$0xff]
      %v250 = vld [vmem:[%s247 + $0x10] sm:$0xff]
      %v251 = vld [vmem:[%s247 + $0x18] sm:$0xff]
      %v252 = vld [vmem:[%s247 + $0x20] sm:$0xff]
      %v253 = vld [vmem:[%s247 + $0x28] sm:$0xff]
      %v254 = vld [vmem:[%s247 + $0x30] sm:$0xff]
      %v255 = vld [vmem:[%s247 + $0x38] sm:$0xff]
      %v256 = vld [vmem:[%s247 + $0x40] sm:$0xff]
      %v257 = vld [vmem:[%s247 + $0x48] sm:$0xff]
      %v258 = vld [vmem:[%s247 + $0x50] sm:$0xff]
      %v259 = vld [vmem:[%s247 + $0x58] sm:$0xff]
      %v260 = vld [vmem:[%s247 + $0x60] sm:$0xff]
      %v261 = vld [vmem:[%s247 + $0x68] sm:$0xff]
      %v262 = vld [vmem:[%s247 + $0x70] sm:$0xff]
      %v263 = vld [vmem:[%s247 + $0x78] sm:$0xff]
      %v264 = vld [vmem:[#allocation2 + $0x1] sm:$0xff]
      %v265 = vld [vmem:[#allocation2 + $0x9] sm:$0xff]
      %v266 = vld [vmem:[#allocation2 + $0x11] sm:$0xff]
      %v267 = vld [vmem:[#allocation2 + $0x19] sm:$0xff]
      %v268 = vld [vmem:[#allocation2 + $0x21] sm:$0xf]
      %s269 = sadd.s32 %s245, 1
      %s270 = smul.u32 %s269, 128
      %s271 = scalar_lea.vmem [#allocation4], %s270
      %v272 = vld [vmem:[%s271] sm:$0xff]
      %v273 = vld [vmem:[%s271 + $0x8] sm:$0xff]
      %v274 = vld [vmem:[%s271 + $0x10] sm:$0xff]
      %v275 = vld [vmem:[%s271 + $0x18] sm:$0xff]
      %v276 = vld [vmem:[%s271 + $0x20] sm:$0xff]
      %v277 = vld [vmem:[%s271 + $0x28] sm:$0xff]
      %v278 = vld [vmem:[%s271 + $0x30] sm:$0xff]
      %v279 = vld [vmem:[%s271 + $0x38] sm:$0xff]
      %v280 = vld [vmem:[%s271 + $0x40] sm:$0xff]
      %v281 = vld [vmem:[%s271 + $0x48] sm:$0xff]
      %v282 = vld [vmem:[%s271 + $0x50] sm:$0xff]
      %v283 = vld [vmem:[%s271 + $0x58] sm:$0xff]
      %v284 = vld [vmem:[%s271 + $0x60] sm:$0xff]
      %v285 = vld [vmem:[%s271 + $0x68] sm:$0xff]
      %v286 = vld [vmem:[%s271 + $0x70] sm:$0xff]
      %v287 = vld [vmem:[%s271 + $0x78] sm:$0xff]
      %288 = vmatprep.subr.mxu0 0.0
      %289 = vmatpush1.msra.mxu0 %v287
      %290 = vmatprep.subr.mxu0 0.0
      %291 = vmatpush1.msra.mxu0 %v286
      %292 = vmatprep.subr.mxu0 0.0
      %293 = vmatpush1.msra.mxu0 %v285
      %294 = vmatprep.subr.mxu0 0.0
      %295 = vmatpush1.msra.mxu0 %v284
      %296 = vmatprep.subr.mxu0 0.0
      %297 = vmatpush1.msra.mxu0 %v283
      %298 = vmatprep.subr.mxu0 0.0
      %299 = vmatpush1.msra.mxu0 %v282
      %300 = vmatprep.subr.mxu0 0.0
      %301 = vmatpush1.msra.mxu0 %v281
      %302 = vmatprep.subr.mxu0 0.0
      %303 = vmatpush1.msra.mxu0 %v280
      %304 = vmatprep.subr.mxu0 0.0
      %305 = vmatpush1.msra.mxu0 %v279
      %306 = vmatprep.subr.mxu0 0.0
      %307 = vmatpush1.msra.mxu0 %v278
      %308 = vmatprep.subr.mxu0 0.0
      %309 = vmatpush1.msra.mxu0 %v277
      %310 = vmatprep.subr.mxu0 0.0
      %311 = vmatpush1.msra.mxu0 %v276
      %312 = vmatprep.subr.mxu0 0.0
      %313 = vmatpush1.msra.mxu0 %v275
      %314 = vmatprep.subr.mxu0 0.0
      %315 = vmatpush1.msra.mxu0 %v274
      %316 = vmatprep.subr.mxu0 0.0
      %317 = vmatpush1.msra.mxu0 %v273
      %318 = vmatprep.subr.mxu0 0.0
      %319 = vmatpush1.msra.mxu0 %v272
      %320 = vmatprep.subr.mxu0 0.0
      %321 = vmatpush2.msra.mxu0 0.0
      %322 = vmatprep.subr.mxu0 0.0
      %323 = vmatpush2.msra.mxu0 0.0
      %324 = vmatprep.subr.mxu0 0.0
      %325 = vmatpush2.msra.mxu0 0.0
      %326 = vmatprep.subr.mxu0 0.0
      %327 = vmatpush2.msra.mxu0 0.0
      %328 = vmatprep.subr.mxu0 0.0
      %329 = vmatpush2.msra.mxu0 0.0
      %330 = vmatprep.subr.mxu0 0.0
      %331 = vmatpush2.msra.mxu0 0.0
      %332 = vmatprep.subr.mxu0 0.0
      %333 = vmatpush2.msra.mxu0 0.0
      %334 = vmatprep.subr.mxu0 0.0
      %335 = vmatpush2.msra.mxu0 0.0
      %336 = vmatprep.subr.mxu0 0.0
      %337 = vmatpush2.msra.mxu0 0.0
      %338 = vmatprep.subr.mxu0 0.0
      %339 = vmatpush2.msra.mxu0 0.0
      %340 = vmatprep.subr.mxu0 0.0
      %341 = vmatpush2.msra.mxu0 0.0
      %342 = vmatprep.subr.mxu0 0.0
      %343 = vmatpush2.msra.mxu0 0.0
      %344 = vmatprep.subr.mxu0 0.0
      %345 = vmatpush2.msra.mxu0 0.0
      %346 = vmatprep.subr.mxu0 0.0
      %347 = vmatpush2.msra.mxu0 0.0
      %348 = vmatprep.subr.mxu0 0.0
      %349 = vmatpush2.msra.mxu0 0.0
      %350 = vmatprep.subr.mxu0 0.0
      %351 = vmatpush2.msra.mxu0 0.0
      %352 = vmatprep.mubr.f32.mxu0 0.0
      %353 = vmatmul.mubr.f32.gmra.mxu0 %v264
      %v354 = vpop.f32.mrf.mxu0
      %v355 = vadd.f32 0.0, %v354
      %v356 = vpop.f32.mrf.mxu0
      %357 = vmatprep.mubr.f32.mxu0 0.0
      %358 = vmatmul.mubr.f32.gmra.mxu0 %v265
      %v359 = vpop.f32.mrf.mxu0
      %v360 = vadd.f32 0.0, %v359
      %v361 = vpop.f32.mrf.mxu0
      %362 = vmatprep.mubr.f32.mxu0 0.0
      %363 = vmatmul.mubr.f32.gmra.mxu0 %v266
      %v364 = vpop.f32.mrf.mxu0
      %v365 = vadd.f32 0.0, %v364
      %v366 = vpop.f32.mrf.mxu0
      %367 = vmatprep.mubr.f32.mxu0 0.0
      %368 = vmatmul.mubr.f32.gmra.mxu0 %v267
      %v369 = vpop.f32.mrf.mxu0
      %v370 = vadd.f32 0.0, %v369
      %v371 = vpop.f32.mrf.mxu0
      %372 = vmatprep.mubr.f32.mxu0 0.0
      %373 = vmatmul.mubr.f32.gmra.mxu0 %v268
      %v374 = vpop.f32.mrf.mxu0
      %v375 = vadd.f32 0.0, %v374
      %v376 = vpop.f32.mrf.mxu0
      %377 = vdwg.mxu0
      %378 = vmatprep.subr.mxu0 0.0
      %379 = vmatpush1.msra.mxu0 %v263
      %380 = vmatprep.subr.mxu0 0.0
      %381 = vmatpush1.msra.mxu0 %v262
      %382 = vmatprep.subr.mxu0 0.0
      %383 = vmatpush1.msra.mxu0 %v261
      %384 = vmatprep.subr.mxu0 0.0
      %385 = vmatpush1.msra.mxu0 %v260
      %386 = vmatprep.subr.mxu0 0.0
      %387 = vmatpush1.msra.mxu0 %v259
      %388 = vmatprep.subr.mxu0 0.0
      %389 = vmatpush1.msra.mxu0 %v258
      %390 = vmatprep.subr.mxu0 0.0
      %391 = vmatpush1.msra.mxu0 %v257
      %392 = vmatprep.subr.mxu0 0.0
      %393 = vmatpush1.msra.mxu0 %v256
      %394 = vmatprep.subr.mxu0 0.0
      %395 = vmatpush1.msra.mxu0 %v255
      %396 = vmatprep.subr.mxu0 0.0
      %397 = vmatpush1.msra.mxu0 %v254
      %398 = vmatprep.subr.mxu0 0.0
      %399 = vmatpush1.msra.mxu0 %v253
      %400 = vmatprep.subr.mxu0 0.0
      %401 = vmatpush1.msra.mxu0 %v252
      %402 = vmatprep.subr.mxu0 0.0
      %403 = vmatpush1.msra.mxu0 %v251
      %404 = vmatprep.subr.mxu0 0.0
      %405 = vmatpush1.msra.mxu0 %v250
      %406 = vmatprep.subr.mxu0 0.0
      %407 = vmatpush1.msra.mxu0 %v249
      %408 = vmatprep.subr.mxu0 0.0
      %409 = vmatpush1.msra.mxu0 %v248
      %410 = vmatprep.subr.mxu0 0.0
      %411 = vmatpush2.msra.mxu0 0.0
      %412 = vmatprep.subr.mxu0 0.0
      %413 = vmatpush2.msra.mxu0 0.0
      %414 = vmatprep.subr.mxu0 0.0
      %415 = vmatpush2.msra.mxu0 0.0
      %416 = vmatprep.subr.mxu0 0.0
      %417 = vmatpush2.msra.mxu0 0.0
      %418 = vmatprep.subr.mxu0 0.0
      %419 = vmatpush2.msra.mxu0 0.0
      %420 = vmatprep.subr.mxu0 0.0
      %421 = vmatpush2.msra.mxu0 0.0
      %422 = vmatprep.subr.mxu0 0.0
      %423 = vmatpush2.msra.mxu0 0.0
      %424 = vmatprep.subr.mxu0 0.0
      %425 = vmatpush2.msra.mxu0 0.0
      %426 = vmatprep.subr.mxu0 0.0
      %427 = vmatpush2.msra.mxu0 0.0
      %428 = vmatprep.subr.mxu0 0.0
      %429 = vmatpush2.msra.mxu0 0.0
      %430 = vmatprep.subr.mxu0 0.0
      %431 = vmatpush2.msra.mxu0 0.0
      %432 = vmatprep.subr.mxu0 0.0
      %433 = vmatpush2.msra.mxu0 0.0
      %434 = vmatprep.subr.mxu0 0.0
      %435 = vmatpush2.msra.mxu0 0.0
      %436 = vmatprep.subr.mxu0 0.0
      %437 = vmatpush2.msra.mxu0 0.0
      %438 = vmatprep.subr.mxu0 0.0
      %439 = vmatpush2.msra.mxu0 0.0
      %440 = vmatprep.subr.mxu0 0.0
      %441 = vmatpush2.msra.mxu0 0.0
      %442 = vmatprep.mubr.f32.mxu0 0.0
      %443 = vmatmul.mubr.f32.gmra.mxu0 %v240
      %v444 = vpop.f32.mrf.mxu0
      %v445 = vadd.f32 %v355, %v444
      %v446 = vpop.f32.mrf.mxu0
      %447 = vmatprep.mubr.f32.mxu0 0.0
      %448 = vmatmul.mubr.f32.gmra.mxu0 %v241
      %v449 = vpop.f32.mrf.mxu0
      %v450 = vadd.f32 %v360, %v449
      %v451 = vpop.f32.mrf.mxu0
      %452 = vmatprep.mubr.f32.mxu0 0.0
      %453 = vmatmul.mubr.f32.gmra.mxu0 %v242
      %v454 = vpop.f32.mrf.mxu0
      %v455 = vadd.f32 %v365, %v454
      %v456 = vpop.f32.mrf.mxu0
      %457 = vmatprep.mubr.f32.mxu0 0.0
      %458 = vmatmul.mubr.f32.gmra.mxu0 %v243
      %v459 = vpop.f32.mrf.mxu0
      %v460 = vadd.f32 %v370, %v459
      %v461 = vpop.f32.mrf.mxu0
      %462 = vmatprep.mubr.f32.mxu0 0.0
      %463 = vmatmul.mubr.f32.gmra.mxu0 %v244
      %v464 = vpop.f32.mrf.mxu0
      %v465 = vadd.f32 %v375, %v464
      %v466 = vpop.f32.mrf.mxu0
      %467 = vdwg.mxu0
      %v468 = vld [vmem:[#allocation2 + $0x2] sm:$0xff]
      %v469 = vld [vmem:[#allocation2 + $0xa] sm:$0xff]
      %v470 = vld [vmem:[#allocation2 + $0x12] sm:$0xff]
      %v471 = vld [vmem:[#allocation2 + $0x1a] sm:$0xff]
      %v472 = vld [vmem:[#allocation2 + $0x22] sm:$0xf]
      %s473 = sadd.s32 %s245, 2
      %s474 = smul.u32 %s473, 128
      %s475 = scalar_lea.vmem [#allocation4], %s474
      %v476 = vld [vmem:[%s475] sm:$0xff]
      %v477 = vld [vmem:[%s475 + $0x8] sm:$0xff]
      %v478 = vld [vmem:[%s475 + $0x10] sm:$0xff]
      %v479 = vld [vmem:[%s475 + $0x18] sm:$0xff]
      %v480 = vld [vmem:[%s475 + $0x20] sm:$0xff]
      %v481 = vld [vmem:[%s475 + $0x28] sm:$0xff]
      %v482 = vld [vmem:[%s475 + $0x30] sm:$0xff]
      %v483 = vld [vmem:[%s475 + $0x38] sm:$0xff]
      %v484 = vld [vmem:[%s475 + $0x40] sm:$0xff]
      %v485 = vld [vmem:[%s475 + $0x48] sm:$0xff]
      %v486 = vld [vmem:[%s475 + $0x50] sm:$0xff]
      %v487 = vld [vmem:[%s475 + $0x58] sm:$0xff]
      %v488 = vld [vmem:[%s475 + $0x60] sm:$0xff]
      %v489 = vld [vmem:[%s475 + $0x68] sm:$0xff]
      %v490 = vld [vmem:[%s475 + $0x70] sm:$0xff]
      %v491 = vld [vmem:[%s475 + $0x78] sm:$0xff]
      %492 = vmatprep.subr.mxu0 0.0
      %493 = vmatpush1.msra.mxu0 %v491
      %494 = vmatprep.subr.mxu0 0.0
      %495 = vmatpush1.msra.mxu0 %v490
      %496 = vmatprep.subr.mxu0 0.0
      %497 = vmatpush1.msra.mxu0 %v489
      %498 = vmatprep.subr.mxu0 0.0
      %499 = vmatpush1.msra.mxu0 %v488
      %500 = vmatprep.subr.mxu0 0.0
      %501 = vmatpush1.msra.mxu0 %v487
      %502 = vmatprep.subr.mxu0 0.0
      %503 = vmatpush1.msra.mxu0 %v486
      %504 = vmatprep.subr.mxu0 0.0
      %505 = vmatpush1.msra.mxu0 %v485
      %506 = vmatprep.subr.mxu0 0.0
      %507 = vmatpush1.msra.mxu0 %v484
      %508 = vmatprep.subr.mxu0 0.0
      %509 = vmatpush1.msra.mxu0 %v483
      %510 = vmatprep.subr.mxu0 0.0
      %511 = vmatpush1.msra.mxu0 %v482
      %512 = vmatprep.subr.mxu0 0.0
      %513 = vmatpush1.msra.mxu0 %v481
      %514 = vmatprep.subr.mxu0 0.0
      %515 = vmatpush1.msra.mxu0 %v480
      %516 = vmatprep.subr.mxu0 0.0
      %517 = vmatpush1.msra.mxu0 %v479
      %518 = vmatprep.subr.mxu0 0.0
      %519 = vmatpush1.msra.mxu0 %v478
      %520 = vmatprep.subr.mxu0 0.0
      %521 = vmatpush1.msra.mxu0 %v477
      %522 = vmatprep.subr.mxu0 0.0
      %523 = vmatpush1.msra.mxu0 %v476
      %524 = vmatprep.subr.mxu0 0.0
      %525 = vmatpush2.msra.mxu0 0.0
      %526 = vmatprep.subr.mxu0 0.0
      %527 = vmatpush2.msra.mxu0 0.0
      %528 = vmatprep.subr.mxu0 0.0
      %529 = vmatpush2.msra.mxu0 0.0
      %530 = vmatprep.subr.mxu0 0.0
      %531 = vmatpush2.msra.mxu0 0.0
      %532 = vmatprep.subr.mxu0 0.0
      %533 = vmatpush2.msra.mxu0 0.0
      %534 = vmatprep.subr.mxu0 0.0
      %535 = vmatpush2.msra.mxu0 0.0
      %536 = vmatprep.subr.mxu0 0.0
      %537 = vmatpush2.msra.mxu0 0.0
      %538 = vmatprep.subr.mxu0 0.0
      %539 = vmatpush2.msra.mxu0 0.0
      %540 = vmatprep.subr.mxu0 0.0
      %541 = vmatpush2.msra.mxu0 0.0
      %542 = vmatprep.subr.mxu0 0.0
      %543 = vmatpush2.msra.mxu0 0.0
      %544 = vmatprep.subr.mxu0 0.0
      %545 = vmatpush2.msra.mxu0 0.0
      %546 = vmatprep.subr.mxu0 0.0
      %547 = vmatpush2.msra.mxu0 0.0
      %548 = vmatprep.subr.mxu0 0.0
      %549 = vmatpush2.msra.mxu0 0.0
      %550 = vmatprep.subr.mxu0 0.0
      %551 = vmatpush2.msra.mxu0 0.0
      %552 = vmatprep.subr.mxu0 0.0
      %553 = vmatpush2.msra.mxu0 0.0
      %554 = vmatprep.subr.mxu0 0.0
      %555 = vmatpush2.msra.mxu0 0.0
      %556 = vmatprep.mubr.f32.mxu0 0.0
      %557 = vmatmul.mubr.f32.gmra.mxu0 %v468
      %v558 = vpop.f32.mrf.mxu0
      %v559 = vadd.f32 0.0, %v558
      %v560 = vpop.f32.mrf.mxu0
      %561 = vmatprep.mubr.f32.mxu0 0.0
      %562 = vmatmul.mubr.f32.gmra.mxu0 %v469
      %v563 = vpop.f32.mrf.mxu0
      %v564 = vadd.f32 0.0, %v563
      %v565 = vpop.f32.mrf.mxu0
      %566 = vmatprep.mubr.f32.mxu0 0.0
      %567 = vmatmul.mubr.f32.gmra.mxu0 %v470
      %v568 = vpop.f32.mrf.mxu0
      %v569 = vadd.f32 0.0, %v568
      %v570 = vpop.f32.mrf.mxu0
      %571 = vmatprep.mubr.f32.mxu0 0.0
      %572 = vmatmul.mubr.f32.gmra.mxu0 %v471
      %v573 = vpop.f32.mrf.mxu0
      %v574 = vadd.f32 0.0, %v573
      %v575 = vpop.f32.mrf.mxu0
      %576 = vmatprep.mubr.f32.mxu0 0.0
      %577 = vmatmul.mubr.f32.gmra.mxu0 %v472
      %v578 = vpop.f32.mrf.mxu0
      %v579 = vadd.f32 0.0, %v578
      %v580 = vpop.f32.mrf.mxu0
      %581 = vdwg.mxu0
      %v582 = vadd.f32 %v445, %v559
      %v583 = vadd.f32 %v450, %v564
      %v584 = vadd.f32 %v455, %v569
      %v585 = vadd.f32 %v460, %v574
      %v586 = vadd.f32 %v465, %v579
      %v587 = vld [vmem:[#allocation2 + $0x3] sm:$0xff]
      %v588 = vld [vmem:[#allocation2 + $0xb] sm:$0xff]
      %v589 = vld [vmem:[#allocation2 + $0x13] sm:$0xff]
      %v590 = vld [vmem:[#allocation2 + $0x1b] sm:$0xff]
      %v591 = vld [vmem:[#allocation2 + $0x23] sm:$0xf]
      %s592 = sadd.s32 %s245, 3
      %s593 = smul.u32 %s592, 128
      %s594 = scalar_lea.vmem [#allocation4], %s593
      %v595 = vld [vmem:[%s594] sm:$0xff]
      %v596 = vld [vmem:[%s594 + $0x8] sm:$0xff]
      %v597 = vld [vmem:[%s594 + $0x10] sm:$0xff]
      %v598 = vld [vmem:[%s594 + $0x18] sm:$0xff]
      %v599 = vld [vmem:[%s594 + $0x20] sm:$0xff]
      %v600 = vld [vmem:[%s594 + $0x28] sm:$0xff]
      %v601 = vld [vmem:[%s594 + $0x30] sm:$0xff]
      %v602 = vld [vmem:[%s594 + $0x38] sm:$0xff]
      %v603 = vld [vmem:[%s594 + $0x40] sm:$0xff]
      %v604 = vld [vmem:[%s594 + $0x48] sm:$0xff]
      %v605 = vld [vmem:[%s594 + $0x50] sm:$0xff]
      %v606 = vld [vmem:[%s594 + $0x58] sm:$0xff]
      %v607 = vld [vmem:[%s594 + $0x60] sm:$0xff]
      %v608 = vld [vmem:[%s594 + $0x68] sm:$0xff]
      %v609 = vld [vmem:[%s594 + $0x70] sm:$0xff]
      %v610 = vld [vmem:[%s594 + $0x78] sm:$0xff]
      %611 = vmatprep.subr.mxu0 0.0
      %612 = vmatpush1.msra.mxu0 %v610
      %613 = vmatprep.subr.mxu0 0.0
      %614 = vmatpush1.msra.mxu0 %v609
      %615 = vmatprep.subr.mxu0 0.0
      %616 = vmatpush1.msra.mxu0 %v608
      %617 = vmatprep.subr.mxu0 0.0
      %618 = vmatpush1.msra.mxu0 %v607
      %619 = vmatprep.subr.mxu0 0.0
      %620 = vmatpush1.msra.mxu0 %v606
      %621 = vmatprep.subr.mxu0 0.0
      %622 = vmatpush1.msra.mxu0 %v605
      %623 = vmatprep.subr.mxu0 0.0
      %624 = vmatpush1.msra.mxu0 %v604
      %625 = vmatprep.subr.mxu0 0.0
      %626 = vmatpush1.msra.mxu0 %v603
      %627 = vmatprep.subr.mxu0 0.0
      %628 = vmatpush1.msra.mxu0 %v602
      %629 = vmatprep.subr.mxu0 0.0
      %630 = vmatpush1.msra.mxu0 %v601
      %631 = vmatprep.subr.mxu0 0.0
      %632 = vmatpush1.msra.mxu0 %v600
      %633 = vmatprep.subr.mxu0 0.0
      %634 = vmatpush1.msra.mxu0 %v599
      %635 = vmatprep.subr.mxu0 0.0
      %636 = vmatpush1.msra.mxu0 %v598
      %637 = vmatprep.subr.mxu0 0.0
      %638 = vmatpush1.msra.mxu0 %v597
      %639 = vmatprep.subr.mxu0 0.0
      %640 = vmatpush1.msra.mxu0 %v596
      %641 = vmatprep.subr.mxu0 0.0
      %642 = vmatpush1.msra.mxu0 %v595
      %643 = vmatprep.subr.mxu0 0.0
      %644 = vmatpush2.msra.mxu0 0.0
      %645 = vmatprep.subr.mxu0 0.0
      %646 = vmatpush2.msra.mxu0 0.0
      %647 = vmatprep.subr.mxu0 0.0
      %648 = vmatpush2.msra.mxu0 0.0
      %649 = vmatprep.subr.mxu0 0.0
      %650 = vmatpush2.msra.mxu0 0.0
      %651 = vmatprep.subr.mxu0 0.0
      %652 = vmatpush2.msra.mxu0 0.0
      %653 = vmatprep.subr.mxu0 0.0
      %654 = vmatpush2.msra.mxu0 0.0
      %655 = vmatprep.subr.mxu0 0.0
      %656 = vmatpush2.msra.mxu0 0.0
      %657 = vmatprep.subr.mxu0 0.0
      %658 = vmatpush2.msra.mxu0 0.0
      %659 = vmatprep.subr.mxu0 0.0
      %660 = vmatpush2.msra.mxu0 0.0
      %661 = vmatprep.subr.mxu0 0.0
      %662 = vmatpush2.msra.mxu0 0.0
      %663 = vmatprep.subr.mxu0 0.0
      %664 = vmatpush2.msra.mxu0 0.0
      %665 = vmatprep.subr.mxu0 0.0
      %666 = vmatpush2.msra.mxu0 0.0
      %667 = vmatprep.subr.mxu0 0.0
      %668 = vmatpush2.msra.mxu0 0.0
      %669 = vmatprep.subr.mxu0 0.0
      %670 = vmatpush2.msra.mxu0 0.0
      %671 = vmatprep.subr.mxu0 0.0
      %672 = vmatpush2.msra.mxu0 0.0
      %673 = vmatprep.subr.mxu0 0.0
      %674 = vmatpush2.msra.mxu0 0.0
      %675 = vmatprep.mubr.f32.mxu0 0.0
      %676 = vmatmul.mubr.f32.gmra.mxu0 %v587
      %v677 = vpop.f32.mrf.mxu0
      %v678 = vadd.f32 0.0, %v677
      %v679 = vpop.f32.mrf.mxu0
      %680 = vmatprep.mubr.f32.mxu0 0.0
      %681 = vmatmul.mubr.f32.gmra.mxu0 %v588
      %v682 = vpop.f32.mrf.mxu0
      %v683 = vadd.f32 0.0, %v682
      %v684 = vpop.f32.mrf.mxu0
      %685 = vmatprep.mubr.f32.mxu0 0.0
      %686 = vmatmul.mubr.f32.gmra.mxu0 %v589
      %v687 = vpop.f32.mrf.mxu0
      %v688 = vadd.f32 0.0, %v687
      %v689 = vpop.f32.mrf.mxu0
      %690 = vmatprep.mubr.f32.mxu0 0.0
      %691 = vmatmul.mubr.f32.gmra.mxu0 %v590
      %v692 = vpop.f32.mrf.mxu0
      %v693 = vadd.f32 0.0, %v692
      %v694 = vpop.f32.mrf.mxu0
      %695 = vmatprep.mubr.f32.mxu0 0.0
      %696 = vmatmul.mubr.f32.gmra.mxu0 %v591
      %v697 = vpop.f32.mrf.mxu0
      %v698 = vadd.f32 0.0, %v697
      %v699 = vpop.f32.mrf.mxu0
      %700 = vdwg.mxu0
      %v701 = vadd.f32 %v582, %v678
      %v702 = vadd.f32 %v583, %v683
      %v703 = vadd.f32 %v584, %v688
      %v704 = vadd.f32 %v585, %v693
      %v705 = vadd.f32 %v586, %v698
      %v706 = vld [vmem:[#allocation2 + $0x4] sm:$0xff]
      %v707 = vld [vmem:[#allocation2 + $0xc] sm:$0xff]
      %v708 = vld [vmem:[#allocation2 + $0x14] sm:$0xff]
      %v709 = vld [vmem:[#allocation2 + $0x1c] sm:$0xff]
      %v710 = vld [vmem:[#allocation2 + $0x24] sm:$0xf]
      %s711 = sadd.s32 %s245, 4
      %s712 = smul.u32 %s711, 128
      %s713 = scalar_lea.vmem [#allocation4], %s712
      %v714 = vld [vmem:[%s713] sm:$0xff]
      %v715 = vld [vmem:[%s713 + $0x8] sm:$0xff]
      %v716 = vld [vmem:[%s713 + $0x10] sm:$0xff]
      %v717 = vld [vmem:[%s713 + $0x18] sm:$0xff]
      %v718 = vld [vmem:[%s713 + $0x20] sm:$0xff]
      %v719 = vld [vmem:[%s713 + $0x28] sm:$0xff]
      %v720 = vld [vmem:[%s713 + $0x30] sm:$0xff]
      %v721 = vld [vmem:[%s713 + $0x38] sm:$0xff]
      %v722 = vld [vmem:[%s713 + $0x40] sm:$0xff]
      %v723 = vld [vmem:[%s713 + $0x48] sm:$0xff]
      %v724 = vld [vmem:[%s713 + $0x50] sm:$0xff]
      %v725 = vld [vmem:[%s713 + $0x58] sm:$0xff]
      %v726 = vld [vmem:[%s713 + $0x60] sm:$0xff]
      %v727 = vld [vmem:[%s713 + $0x68] sm:$0xff]
      %v728 = vld [vmem:[%s713 + $0x70] sm:$0xff]
      %v729 = vld [vmem:[%s713 + $0x78] sm:$0xff]
      %730 = vmatprep.subr.mxu0 0.0
      %731 = vmatpush1.msra.mxu0 %v729
      %732 = vmatprep.subr.mxu0 0.0
      %733 = vmatpush1.msra.mxu0 %v728
      %734 = vmatprep.subr.mxu0 0.0
      %735 = vmatpush1.msra.mxu0 %v727
      %736 = vmatprep.subr.mxu0 0.0
      %737 = vmatpush1.msra.mxu0 %v726
      %738 = vmatprep.subr.mxu0 0.0
      %739 = vmatpush1.msra.mxu0 %v725
      %740 = vmatprep.subr.mxu0 0.0
      %741 = vmatpush1.msra.mxu0 %v724
      %742 = vmatprep.subr.mxu0 0.0
      %743 = vmatpush1.msra.mxu0 %v723
      %744 = vmatprep.subr.mxu0 0.0
      %745 = vmatpush1.msra.mxu0 %v722
      %746 = vmatprep.subr.mxu0 0.0
      %747 = vmatpush1.msra.mxu0 %v721
      %748 = vmatprep.subr.mxu0 0.0
      %749 = vmatpush1.msra.mxu0 %v720
      %750 = vmatprep.subr.mxu0 0.0
      %751 = vmatpush1.msra.mxu0 %v719
      %752 = vmatprep.subr.mxu0 0.0
      %753 = vmatpush1.msra.mxu0 %v718
      %754 = vmatprep.subr.mxu0 0.0
      %755 = vmatpush1.msra.mxu0 %v717
      %756 = vmatprep.subr.mxu0 0.0
      %757 = vmatpush1.msra.mxu0 %v716
      %758 = vmatprep.subr.mxu0 0.0
      %759 = vmatpush1.msra.mxu0 %v715
      %760 = vmatprep.subr.mxu0 0.0
      %761 = vmatpush1.msra.mxu0 %v714
      %762 = vmatprep.subr.mxu0 0.0
      %763 = vmatpush2.msra.mxu0 0.0
      %764 = vmatprep.subr.mxu0 0.0
      %765 = vmatpush2.msra.mxu0 0.0
      %766 = vmatprep.subr.mxu0 0.0
      %767 = vmatpush2.msra.mxu0 0.0
      %768 = vmatprep.subr.mxu0 0.0
      %769 = vmatpush2.msra.mxu0 0.0
      %770 = vmatprep.subr.mxu0 0.0
      %771 = vmatpush2.msra.mxu0 0.0
      %772 = vmatprep.subr.mxu0 0.0
      %773 = vmatpush2.msra.mxu0 0.0
      %774 = vmatprep.subr.mxu0 0.0
      %775 = vmatpush2.msra.mxu0 0.0
      %776 = vmatprep.subr.mxu0 0.0
      %777 = vmatpush2.msra.mxu0 0.0
      %778 = vmatprep.subr.mxu0 0.0
      %779 = vmatpush2.msra.mxu0 0.0
      %780 = vmatprep.subr.mxu0 0.0
      %781 = vmatpush2.msra.mxu0 0.0
      %782 = vmatprep.subr.mxu0 0.0
      %783 = vmatpush2.msra.mxu0 0.0
      %784 = vmatprep.subr.mxu0 0.0
      %785 = vmatpush2.msra.mxu0 0.0
      %786 = vmatprep.subr.mxu0 0.0
      %787 = vmatpush2.msra.mxu0 0.0
      %788 = vmatprep.subr.mxu0 0.0
      %789 = vmatpush2.msra.mxu0 0.0
      %790 = vmatprep.subr.mxu0 0.0
      %791 = vmatpush2.msra.mxu0 0.0
      %792 = vmatprep.subr.mxu0 0.0
      %793 = vmatpush2.msra.mxu0 0.0
      %794 = vmatprep.mubr.f32.mxu0 0.0
      %795 = vmatmul.mubr.f32.gmra.mxu0 %v706
      %v796 = vpop.f32.mrf.mxu0
      %v797 = vadd.f32 0.0, %v796
      %v798 = vpop.f32.mrf.mxu0
      %799 = vmatprep.mubr.f32.mxu0 0.0
      %800 = vmatmul.mubr.f32.gmra.mxu0 %v707
      %v801 = vpop.f32.mrf.mxu0
      %v802 = vadd.f32 0.0, %v801
      %v803 = vpop.f32.mrf.mxu0
      %804 = vmatprep.mubr.f32.mxu0 0.0
      %805 = vmatmul.mubr.f32.gmra.mxu0 %v708
      %v806 = vpop.f32.mrf.mxu0
      %v807 = vadd.f32 0.0, %v806
      %v808 = vpop.f32.mrf.mxu0
      %809 = vmatprep.mubr.f32.mxu0 0.0
      %810 = vmatmul.mubr.f32.gmra.mxu0 %v709
      %v811 = vpop.f32.mrf.mxu0
      %v812 = vadd.f32 0.0, %v811
      %v813 = vpop.f32.mrf.mxu0
      %814 = vmatprep.mubr.f32.mxu0 0.0
      %815 = vmatmul.mubr.f32.gmra.mxu0 %v710
      %v816 = vpop.f32.mrf.mxu0
      %v817 = vadd.f32 0.0, %v816
      %v818 = vpop.f32.mrf.mxu0
      %819 = vdwg.mxu0
      %v820 = vadd.f32 %v701, %v797
      %v821 = vadd.f32 %v702, %v802
      %v822 = vadd.f32 %v703, %v807
      %v823 = vadd.f32 %v704, %v812
      %v824 = vadd.f32 %v705, %v817
      %v826 = vlaneseq
      %v827 = vshrl.u32 %v826, 7
      %v828 = vsub.s32 0, %v827
      %v829 = vrot.slane %v239, %v828
      %v831 = vadd.f32 %v820, %v829
      %v832 = vadd.f32 %v821, %v829
      %v833 = vadd.f32 %v822, %v829
      %v834 = vadd.f32 %v823, %v829
      %v835 = vadd.f32 %v824, %v829
      %vm836 = vcmp.ge.f32.partialorder %v831, 0.0
      %vm837 = vcmp.ge.f32.partialorder %v832, 0.0
      %vm838 = vcmp.ge.f32.partialorder %v833, 0.0
      %vm839 = vcmp.ge.f32.partialorder %v834, 0.0
      %vm840 = vcmp.ge.f32.partialorder %v835, 0.0
      %v841 = vmul.f32 %v831, 0.01
      %v842 = vmul.f32 %v832, 0.01
      %v843 = vmul.f32 %v833, 0.01
      %v844 = vmul.f32 %v834, 0.01
      %v845 = vmul.f32 %v835, 0.01
      %v846 = vsel %vm836, %v831, %v841
      %v847 = vsel %vm837, %v832, %v842
      %v848 = vsel %vm838, %v833, %v843
      %v849 = vsel %vm839, %v834, %v844
      %v850 = vsel %vm840, %v835, %v845
      %851 = vst [vmem:[#allocation2 + $0x2] sm:$0xff] %v846
      %852 = vst [vmem:[#allocation2 + $0xa] sm:$0xff] %v847
      %853 = vst [vmem:[#allocation2 + $0x12] sm:$0xff] %v848
      %854 = vst [vmem:[#allocation2 + $0x1a] sm:$0xff] %v849
      %855 = vst [vmem:[#allocation2 + $0x22] sm:$0xf] %v850
      %856 = vst [vmem:[#allocation2 + $0x12] sm:$0xf] 0.0
      %v857 = vld [vmem:[#allocation3] sm:$0xff]
      %v858 = vld [vmem:[#allocation3 + $0x8] sm:$0xff]
      %v859 = vld [vmem:[#allocation3 + $0x10] sm:$0xff]
      %v860 = vld [vmem:[#allocation3 + $0x18] sm:$0xff]
      %v861 = vld [vmem:[#allocation3 + $0x20] sm:$0xf]
      %s862 = scalar_lea.vmem %s6, %s222
      %v863 = vld [vmem:[%s862] sm:$0x1]
      %v864 = vld [vmem:[#allocation2] sm:$0xff]
      %v865 = vld [vmem:[#allocation2 + $0x8] sm:$0xff]
      %v866 = vld [vmem:[#allocation2 + $0x10] sm:$0xff]
      %v867 = vld [vmem:[#allocation2 + $0x18] sm:$0xff]
      %v868 = vld [vmem:[#allocation2 + $0x20] sm:$0xf]
      %s869 = scalar_lea.vmem [#allocation7], %s246
      %v870 = vld [vmem:[%s869] sm:$0xff]
      %v871 = vld [vmem:[%s869 + $0x8] sm:$0xff]
      %v872 = vld [vmem:[%s869 + $0x10] sm:$0xff]
      %v873 = vld [vmem:[%s869 + $0x18] sm:$0xff]
      %v874 = vld [vmem:[%s869 + $0x20] sm:$0xff]
      %v875 = vld [vmem:[%s869 + $0x28] sm:$0xff]
      %v876 = vld [vmem:[%s869 + $0x30] sm:$0xff]
      %v877 = vld [vmem:[%s869 + $0x38] sm:$0xff]
      %v878 = vld [vmem:[%s869 + $0x40] sm:$0xff]
      %v879 = vld [vmem:[%s869 + $0x48] sm:$0xff]
      %v880 = vld [vmem:[%s869 + $0x50] sm:$0xff]
      %v881 = vld [vmem:[%s869 + $0x58] sm:$0xff]
      %v882 = vld [vmem:[%s869 + $0x60] sm:$0xff]
      %v883 = vld [vmem:[%s869 + $0x68] sm:$0xff]
      %v884 = vld [vmem:[%s869 + $0x70] sm:$0xff]
      %v885 = vld [vmem:[%s869 + $0x78] sm:$0xff]
      %v886 = vld [vmem:[#allocation2 + $0x1] sm:$0xff]
      %v887 = vld [vmem:[#allocation2 + $0x9] sm:$0xff]
      %v888 = vld [vmem:[#allocation2 + $0x11] sm:$0xff]
      %v889 = vld [vmem:[#allocation2 + $0x19] sm:$0xff]
      %v890 = vld [vmem:[#allocation2 + $0x21] sm:$0xf]
      %s891 = scalar_lea.vmem [#allocation7], %s270
      %v892 = vld [vmem:[%s891] sm:$0xff]
      %v893 = vld [vmem:[%s891 + $0x8] sm:$0xff]
      %v894 = vld [vmem:[%s891 + $0x10] sm:$0xff]
      %v895 = vld [vmem:[%s891 + $0x18] sm:$0xff]
      %v896 = vld [vmem:[%s891 + $0x20] sm:$0xff]
      %v897 = vld [vmem:[%s891 + $0x28] sm:$0xff]
      %v898 = vld [vmem:[%s891 + $0x30] sm:$0xff]
      %v899 = vld [vmem:[%s891 + $0x38] sm:$0xff]
      %v900 = vld [vmem:[%s891 + $0x40] sm:$0xff]
      %v901 = vld [vmem:[%s891 + $0x48] sm:$0xff]
      %v902 = vld [vmem:[%s891 + $0x50] sm:$0xff]
      %v903 = vld [vmem:[%s891 + $0x58] sm:$0xff]
      %v904 = vld [vmem:[%s891 + $0x60] sm:$0xff]
      %v905 = vld [vmem:[%s891 + $0x68] sm:$0xff]
      %v906 = vld [vmem:[%s891 + $0x70] sm:$0xff]
      %v907 = vld [vmem:[%s891 + $0x78] sm:$0xff]
      %908 = vmatprep.subr.mxu0 0.0
      %909 = vmatpush1.msra.mxu0 %v907
      %910 = vmatprep.subr.mxu0 0.0
      %911 = vmatpush1.msra.mxu0 %v906
      %912 = vmatprep.subr.mxu0 0.0
      %913 = vmatpush1.msra.mxu0 %v905
      %914 = vmatprep.subr.mxu0 0.0
      %915 = vmatpush1.msra.mxu0 %v904
      %916 = vmatprep.subr.mxu0 0.0
      %917 = vmatpush1.msra.mxu0 %v903
      %918 = vmatprep.subr.mxu0 0.0
      %919 = vmatpush1.msra.mxu0 %v902
      %920 = vmatprep.subr.mxu0 0.0
      %921 = vmatpush1.msra.mxu0 %v901
      %922 = vmatprep.subr.mxu0 0.0
      %923 = vmatpush1.msra.mxu0 %v900
      %924 = vmatprep.subr.mxu0 0.0
      %925 = vmatpush1.msra.mxu0 %v899
      %926 = vmatprep.subr.mxu0 0.0
      %927 = vmatpush1.msra.mxu0 %v898
      %928 = vmatprep.subr.mxu0 0.0
      %929 = vmatpush1.msra.mxu0 %v897
      %930 = vmatprep.subr.mxu0 0.0
      %931 = vmatpush1.msra.mxu0 %v896
      %932 = vmatprep.subr.mxu0 0.0
      %933 = vmatpush1.msra.mxu0 %v895
      %934 = vmatprep.subr.mxu0 0.0
      %935 = vmatpush1.msra.mxu0 %v894
      %936 = vmatprep.subr.mxu0 0.0
      %937 = vmatpush1.msra.mxu0 %v893
      %938 = vmatprep.subr.mxu0 0.0
      %939 = vmatpush1.msra.mxu0 %v892
      %940 = vmatprep.subr.mxu0 0.0
      %941 = vmatpush2.msra.mxu0 0.0
      %942 = vmatprep.subr.mxu0 0.0
      %943 = vmatpush2.msra.mxu0 0.0
      %944 = vmatprep.subr.mxu0 0.0
      %945 = vmatpush2.msra.mxu0 0.0
      %946 = vmatprep.subr.mxu0 0.0
      %947 = vmatpush2.msra.mxu0 0.0
      %948 = vmatprep.subr.mxu0 0.0
      %949 = vmatpush2.msra.mxu0 0.0
      %950 = vmatprep.subr.mxu0 0.0
      %951 = vmatpush2.msra.mxu0 0.0
      %952 = vmatprep.subr.mxu0 0.0
      %953 = vmatpush2.msra.mxu0 0.0
      %954 = vmatprep.subr.mxu0 0.0
      %955 = vmatpush2.msra.mxu0 0.0
      %956 = vmatprep.subr.mxu0 0.0
      %957 = vmatpush2.msra.mxu0 0.0
      %958 = vmatprep.subr.mxu0 0.0
      %959 = vmatpush2.msra.mxu0 0.0
      %960 = vmatprep.subr.mxu0 0.0
      %961 = vmatpush2.msra.mxu0 0.0
      %962 = vmatprep.subr.mxu0 0.0
      %963 = vmatpush2.msra.mxu0 0.0
      %964 = vmatprep.subr.mxu0 0.0
      %965 = vmatpush2.msra.mxu0 0.0
      %966 = vmatprep.subr.mxu0 0.0
      %967 = vmatpush2.msra.mxu0 0.0
      %968 = vmatprep.subr.mxu0 0.0
      %969 = vmatpush2.msra.mxu0 0.0
      %970 = vmatprep.subr.mxu0 0.0
      %971 = vmatpush2.msra.mxu0 0.0
      %972 = vmatprep.mubr.f32.mxu0 0.0
      %973 = vmatmul.mubr.f32.gmra.mxu0 %v886
      %v974 = vpop.f32.mrf.mxu0
      %v975 = vadd.f32 0.0, %v974
      %v976 = vpop.f32.mrf.mxu0
      %977 = vmatprep.mubr.f32.mxu0 0.0
      %978 = vmatmul.mubr.f32.gmra.mxu0 %v887
      %v979 = vpop.f32.mrf.mxu0
      %v980 = vadd.f32 0.0, %v979
      %v981 = vpop.f32.mrf.mxu0
      %982 = vmatprep.mubr.f32.mxu0 0.0
      %983 = vmatmul.mubr.f32.gmra.mxu0 %v888
      %v984 = vpop.f32.mrf.mxu0
      %v985 = vadd.f32 0.0, %v984
      %v986 = vpop.f32.mrf.mxu0
      %987 = vmatprep.mubr.f32.mxu0 0.0
      %988 = vmatmul.mubr.f32.gmra.mxu0 %v889
      %v989 = vpop.f32.mrf.mxu0
      %v990 = vadd.f32 0.0, %v989
      %v991 = vpop.f32.mrf.mxu0
      %992 = vmatprep.mubr.f32.mxu0 0.0
      %993 = vmatmul.mubr.f32.gmra.mxu0 %v890
      %v994 = vpop.f32.mrf.mxu0
      %v995 = vadd.f32 0.0, %v994
      %v996 = vpop.f32.mrf.mxu0
      %997 = vdwg.mxu0
      %998 = vmatprep.subr.mxu0 0.0
      %999 = vmatpush1.msra.mxu0 %v885
      %1000 = vmatprep.subr.mxu0 0.0
      %1001 = vmatpush1.msra.mxu0 %v884
      %1002 = vmatprep.subr.mxu0 0.0
      %1003 = vmatpush1.msra.mxu0 %v883
      %1004 = vmatprep.subr.mxu0 0.0
      %1005 = vmatpush1.msra.mxu0 %v882
      %1006 = vmatprep.subr.mxu0 0.0
      %1007 = vmatpush1.msra.mxu0 %v881
      %1008 = vmatprep.subr.mxu0 0.0
      %1009 = vmatpush1.msra.mxu0 %v880
      %1010 = vmatprep.subr.mxu0 0.0
      %1011 = vmatpush1.msra.mxu0 %v879
      %1012 = vmatprep.subr.mxu0 0.0
      %1013 = vmatpush1.msra.mxu0 %v878
      %1014 = vmatprep.subr.mxu0 0.0
      %1015 = vmatpush1.msra.mxu0 %v877
      %1016 = vmatprep.subr.mxu0 0.0
      %1017 = vmatpush1.msra.mxu0 %v876
      %1018 = vmatprep.subr.mxu0 0.0
      %1019 = vmatpush1.msra.mxu0 %v875
      %1020 = vmatprep.subr.mxu0 0.0
      %1021 = vmatpush1.msra.mxu0 %v874
      %1022 = vmatprep.subr.mxu0 0.0
      %1023 = vmatpush1.msra.mxu0 %v873
      %1024 = vmatprep.subr.mxu0 0.0
      %1025 = vmatpush1.msra.mxu0 %v872
      %1026 = vmatprep.subr.mxu0 0.0
      %1027 = vmatpush1.msra.mxu0 %v871
      %1028 = vmatprep.subr.mxu0 0.0
      %1029 = vmatpush1.msra.mxu0 %v870
      %1030 = vmatprep.subr.mxu0 0.0
      %1031 = vmatpush2.msra.mxu0 0.0
      %1032 = vmatprep.subr.mxu0 0.0
      %1033 = vmatpush2.msra.mxu0 0.0
      %1034 = vmatprep.subr.mxu0 0.0
      %1035 = vmatpush2.msra.mxu0 0.0
      %1036 = vmatprep.subr.mxu0 0.0
      %1037 = vmatpush2.msra.mxu0 0.0
      %1038 = vmatprep.subr.mxu0 0.0
      %1039 = vmatpush2.msra.mxu0 0.0
      %1040 = vmatprep.subr.mxu0 0.0
      %1041 = vmatpush2.msra.mxu0 0.0
      %1042 = vmatprep.subr.mxu0 0.0
      %1043 = vmatpush2.msra.mxu0 0.0
      %1044 = vmatprep.subr.mxu0 0.0
      %1045 = vmatpush2.msra.mxu0 0.0
      %1046 = vmatprep.subr.mxu0 0.0
      %1047 = vmatpush2.msra.mxu0 0.0
      %1048 = vmatprep.subr.mxu0 0.0
      %1049 = vmatpush2.msra.mxu0 0.0
      %1050 = vmatprep.subr.mxu0 0.0
      %1051 = vmatpush2.msra.mxu0 0.0
      %1052 = vmatprep.subr.mxu0 0.0
      %1053 = vmatpush2.msra.mxu0 0.0
      %1054 = vmatprep.subr.mxu0 0.0
      %1055 = vmatpush2.msra.mxu0 0.0
      %1056 = vmatprep.subr.mxu0 0.0
      %1057 = vmatpush2.msra.mxu0 0.0
      %1058 = vmatprep.subr.mxu0 0.0
      %1059 = vmatpush2.msra.mxu0 0.0
      %1060 = vmatprep.subr.mxu0 0.0
      %1061 = vmatpush2.msra.mxu0 0.0
      %1062 = vmatprep.mubr.f32.mxu0 0.0
      %1063 = vmatmul.mubr.f32.gmra.mxu0 %v864
      %v1064 = vpop.f32.mrf.mxu0
      %v1065 = vadd.f32 %v975, %v1064
      %v1066 = vpop.f32.mrf.mxu0
      %1067 = vmatprep.mubr.f32.mxu0 0.0
      %1068 = vmatmul.mubr.f32.gmra.mxu0 %v865
      %v1069 = vpop.f32.mrf.mxu0
      %v1070 = vadd.f32 %v980, %v1069
      %v1071 = vpop.f32.mrf.mxu0
      %1072 = vmatprep.mubr.f32.mxu0 0.0
      %1073 = vmatmul.mubr.f32.gmra.mxu0 %v866
      %v1074 = vpop.f32.mrf.mxu0
      %v1075 = vadd.f32 %v985, %v1074
      %v1076 = vpop.f32.mrf.mxu0
      %1077 = vmatprep.mubr.f32.mxu0 0.0
      %1078 = vmatmul.mubr.f32.gmra.mxu0 %v867
      %v1079 = vpop.f32.mrf.mxu0
      %v1080 = vadd.f32 %v990, %v1079
      %v1081 = vpop.f32.mrf.mxu0
      %1082 = vmatprep.mubr.f32.mxu0 0.0
      %1083 = vmatmul.mubr.f32.gmra.mxu0 %v868
      %v1084 = vpop.f32.mrf.mxu0
      %v1085 = vadd.f32 %v995, %v1084
      %v1086 = vpop.f32.mrf.mxu0
      %1087 = vdwg.mxu0
      %v1088 = vld [vmem:[#allocation2 + $0x2] sm:$0xff]
      %v1089 = vld [vmem:[#allocation2 + $0xa] sm:$0xff]
      %v1090 = vld [vmem:[#allocation2 + $0x12] sm:$0xff]
      %v1091 = vld [vmem:[#allocation2 + $0x1a] sm:$0xff]
      %v1092 = vld [vmem:[#allocation2 + $0x22] sm:$0xf]
      %s1093 = scalar_lea.vmem [#allocation7], %s474
      %v1094 = vld [vmem:[%s1093] sm:$0xff]
      %v1095 = vld [vmem:[%s1093 + $0x8] sm:$0xff]
      %v1096 = vld [vmem:[%s1093 + $0x10] sm:$0xff]
      %v1097 = vld [vmem:[%s1093 + $0x18] sm:$0xff]
      %v1098 = vld [vmem:[%s1093 + $0x20] sm:$0xff]
      %v1099 = vld [vmem:[%s1093 + $0x28] sm:$0xff]
      %v1100 = vld [vmem:[%s1093 + $0x30] sm:$0xff]
      %v1101 = vld [vmem:[%s1093 + $0x38] sm:$0xff]
      %v1102 = vld [vmem:[%s1093 + $0x40] sm:$0xff]
      %v1103 = vld [vmem:[%s1093 + $0x48] sm:$0xff]
      %v1104 = vld [vmem:[%s1093 + $0x50] sm:$0xff]
      %v1105 = vld [vmem:[%s1093 + $0x58] sm:$0xff]
      %v1106 = vld [vmem:[%s1093 + $0x60] sm:$0xff]
      %v1107 = vld [vmem:[%s1093 + $0x68] sm:$0xff]
      %v1108 = vld [vmem:[%s1093 + $0x70] sm:$0xff]
      %v1109 = vld [vmem:[%s1093 + $0x78] sm:$0xff]
      %1110 = vmatprep.subr.mxu0 0.0
      %1111 = vmatpush1.msra.mxu0 %v1109
      %1112 = vmatprep.subr.mxu0 0.0
      %1113 = vmatpush1.msra.mxu0 %v1108
      %1114 = vmatprep.subr.mxu0 0.0
      %1115 = vmatpush1.msra.mxu0 %v1107
      %1116 = vmatprep.subr.mxu0 0.0
      %1117 = vmatpush1.msra.mxu0 %v1106
      %1118 = vmatprep.subr.mxu0 0.0
      %1119 = vmatpush1.msra.mxu0 %v1105
      %1120 = vmatprep.subr.mxu0 0.0
      %1121 = vmatpush1.msra.mxu0 %v1104
      %1122 = vmatprep.subr.mxu0 0.0
      %1123 = vmatpush1.msra.mxu0 %v1103
      %1124 = vmatprep.subr.mxu0 0.0
      %1125 = vmatpush1.msra.mxu0 %v1102
      %1126 = vmatprep.subr.mxu0 0.0
      %1127 = vmatpush1.msra.mxu0 %v1101
      %1128 = vmatprep.subr.mxu0 0.0
      %1129 = vmatpush1.msra.mxu0 %v1100
      %1130 = vmatprep.subr.mxu0 0.0
      %1131 = vmatpush1.msra.mxu0 %v1099
      %1132 = vmatprep.subr.mxu0 0.0
      %1133 = vmatpush1.msra.mxu0 %v1098
      %1134 = vmatprep.subr.mxu0 0.0
      %1135 = vmatpush1.msra.mxu0 %v1097
      %1136 = vmatprep.subr.mxu0 0.0
      %1137 = vmatpush1.msra.mxu0 %v1096
      %1138 = vmatprep.subr.mxu0 0.0
      %1139 = vmatpush1.msra.mxu0 %v1095
      %1140 = vmatprep.subr.mxu0 0.0
      %1141 = vmatpush1.msra.mxu0 %v1094
      %1142 = vmatprep.subr.mxu0 0.0
      %1143 = vmatpush2.msra.mxu0 0.0
      %1144 = vmatprep.subr.mxu0 0.0
      %1145 = vmatpush2.msra.mxu0 0.0
      %1146 = vmatprep.subr.mxu0 0.0
      %1147 = vmatpush2.msra.mxu0 0.0
      %1148 = vmatprep.subr.mxu0 0.0
      %1149 = vmatpush2.msra.mxu0 0.0
      %1150 = vmatprep.subr.mxu0 0.0
      %1151 = vmatpush2.msra.mxu0 0.0
      %1152 = vmatprep.subr.mxu0 0.0
      %1153 = vmatpush2.msra.mxu0 0.0
      %1154 = vmatprep.subr.mxu0 0.0
      %1155 = vmatpush2.msra.mxu0 0.0
      %1156 = vmatprep.subr.mxu0 0.0
      %1157 = vmatpush2.msra.mxu0 0.0
      %1158 = vmatprep.subr.mxu0 0.0
      %1159 = vmatpush2.msra.mxu0 0.0
      %1160 = vmatprep.subr.mxu0 0.0
      %1161 = vmatpush2.msra.mxu0 0.0
      %1162 = vmatprep.subr.mxu0 0.0
      %1163 = vmatpush2.msra.mxu0 0.0
      %1164 = vmatprep.subr.mxu0 0.0
      %1165 = vmatpush2.msra.mxu0 0.0
      %1166 = vmatprep.subr.mxu0 0.0
      %1167 = vmatpush2.msra.mxu0 0.0
      %1168 = vmatprep.subr.mxu0 0.0
      %1169 = vmatpush2.msra.mxu0 0.0
      %1170 = vmatprep.subr.mxu0 0.0
      %1171 = vmatpush2.msra.mxu0 0.0
      %1172 = vmatprep.subr.mxu0 0.0
      %1173 = vmatpush2.msra.mxu0 0.0
      %1174 = vmatprep.mubr.f32.mxu0 0.0
      %1175 = vmatmul.mubr.f32.gmra.mxu0 %v1088
      %v1176 = vpop.f32.mrf.mxu0
      %v1177 = vadd.f32 0.0, %v1176
      %v1178 = vpop.f32.mrf.mxu0
      %1179 = vmatprep.mubr.f32.mxu0 0.0
      %1180 = vmatmul.mubr.f32.gmra.mxu0 %v1089
      %v1181 = vpop.f32.mrf.mxu0
      %v1182 = vadd.f32 0.0, %v1181
      %v1183 = vpop.f32.mrf.mxu0
      %1184 = vmatprep.mubr.f32.mxu0 0.0
      %1185 = vmatmul.mubr.f32.gmra.mxu0 %v1090
      %v1186 = vpop.f32.mrf.mxu0
      %v1187 = vadd.f32 0.0, %v1186
      %v1188 = vpop.f32.mrf.mxu0
      %1189 = vmatprep.mubr.f32.mxu0 0.0
      %1190 = vmatmul.mubr.f32.gmra.mxu0 %v1091
      %v1191 = vpop.f32.mrf.mxu0
      %v1192 = vadd.f32 0.0, %v1191
      %v1193 = vpop.f32.mrf.mxu0
      %1194 = vmatprep.mubr.f32.mxu0 0.0
      %1195 = vmatmul.mubr.f32.gmra.mxu0 %v1092
      %v1196 = vpop.f32.mrf.mxu0
      %v1197 = vadd.f32 0.0, %v1196
      %v1198 = vpop.f32.mrf.mxu0
      %1199 = vdwg.mxu0
      %v1200 = vadd.f32 %v1065, %v1177
      %v1201 = vadd.f32 %v1070, %v1182
      %v1202 = vadd.f32 %v1075, %v1187
      %v1203 = vadd.f32 %v1080, %v1192
      %v1204 = vadd.f32 %v1085, %v1197
      %v1205 = vld [vmem:[#allocation2 + $0x3] sm:$0xff]
      %v1206 = vld [vmem:[#allocation2 + $0xb] sm:$0xff]
      %v1207 = vld [vmem:[#allocation2 + $0x13] sm:$0xff]
      %v1208 = vld [vmem:[#allocation2 + $0x1b] sm:$0xff]
      %v1209 = vld [vmem:[#allocation2 + $0x23] sm:$0xf]
      %s1210 = scalar_lea.vmem [#allocation7], %s593
      %v1211 = vld [vmem:[%s1210] sm:$0xff]
      %v1212 = vld [vmem:[%s1210 + $0x8] sm:$0xff]
      %v1213 = vld [vmem:[%s1210 + $0x10] sm:$0xff]
      %v1214 = vld [vmem:[%s1210 + $0x18] sm:$0xff]
      %v1215 = vld [vmem:[%s1210 + $0x20] sm:$0xff]
      %v1216 = vld [vmem:[%s1210 + $0x28] sm:$0xff]
      %v1217 = vld [vmem:[%s1210 + $0x30] sm:$0xff]
      %v1218 = vld [vmem:[%s1210 + $0x38] sm:$0xff]
      %v1219 = vld [vmem:[%s1210 + $0x40] sm:$0xff]
      %v1220 = vld [vmem:[%s1210 + $0x48] sm:$0xff]
      %v1221 = vld [vmem:[%s1210 + $0x50] sm:$0xff]
      %v1222 = vld [vmem:[%s1210 + $0x58] sm:$0xff]
      %v1223 = vld [vmem:[%s1210 + $0x60] sm:$0xff]
      %v1224 = vld [vmem:[%s1210 + $0x68] sm:$0xff]
      %v1225 = vld [vmem:[%s1210 + $0x70] sm:$0xff]
      %v1226 = vld [vmem:[%s1210 + $0x78] sm:$0xff]
      %1227 = vmatprep.subr.mxu0 0.0
      %1228 = vmatpush1.msra.mxu0 %v1226
      %1229 = vmatprep.subr.mxu0 0.0
      %1230 = vmatpush1.msra.mxu0 %v1225
      %1231 = vmatprep.subr.mxu0 0.0
      %1232 = vmatpush1.msra.mxu0 %v1224
      %1233 = vmatprep.subr.mxu0 0.0
      %1234 = vmatpush1.msra.mxu0 %v1223
      %1235 = vmatprep.subr.mxu0 0.0
      %1236 = vmatpush1.msra.mxu0 %v1222
      %1237 = vmatprep.subr.mxu0 0.0
      %1238 = vmatpush1.msra.mxu0 %v1221
      %1239 = vmatprep.subr.mxu0 0.0
      %1240 = vmatpush1.msra.mxu0 %v1220
      %1241 = vmatprep.subr.mxu0 0.0
      %1242 = vmatpush1.msra.mxu0 %v1219
      %1243 = vmatprep.subr.mxu0 0.0
      %1244 = vmatpush1.msra.mxu0 %v1218
      %1245 = vmatprep.subr.mxu0 0.0
      %1246 = vmatpush1.msra.mxu0 %v1217
      %1247 = vmatprep.subr.mxu0 0.0
      %1248 = vmatpush1.msra.mxu0 %v1216
      %1249 = vmatprep.subr.mxu0 0.0
      %1250 = vmatpush1.msra.mxu0 %v1215
      %1251 = vmatprep.subr.mxu0 0.0
      %1252 = vmatpush1.msra.mxu0 %v1214
      %1253 = vmatprep.subr.mxu0 0.0
      %1254 = vmatpush1.msra.mxu0 %v1213
      %1255 = vmatprep.subr.mxu0 0.0
      %1256 = vmatpush1.msra.mxu0 %v1212
      %1257 = vmatprep.subr.mxu0 0.0
      %1258 = vmatpush1.msra.mxu0 %v1211
      %1259 = vmatprep.subr.mxu0 0.0
      %1260 = vmatpush2.msra.mxu0 0.0
      %1261 = vmatprep.subr.mxu0 0.0
      %1262 = vmatpush2.msra.mxu0 0.0
      %1263 = vmatprep.subr.mxu0 0.0
      %1264 = vmatpush2.msra.mxu0 0.0
      %1265 = vmatprep.subr.mxu0 0.0
      %1266 = vmatpush2.msra.mxu0 0.0
      %1267 = vmatprep.subr.mxu0 0.0
      %1268 = vmatpush2.msra.mxu0 0.0
      %1269 = vmatprep.subr.mxu0 0.0
      %1270 = vmatpush2.msra.mxu0 0.0
      %1271 = vmatprep.subr.mxu0 0.0
      %1272 = vmatpush2.msra.mxu0 0.0
      %1273 = vmatprep.subr.mxu0 0.0
      %1274 = vmatpush2.msra.mxu0 0.0
      %1275 = vmatprep.subr.mxu0 0.0
      %1276 = vmatpush2.msra.mxu0 0.0
      %1277 = vmatprep.subr.mxu0 0.0
      %1278 = vmatpush2.msra.mxu0 0.0
      %1279 = vmatprep.subr.mxu0 0.0
      %1280 = vmatpush2.msra.mxu0 0.0
      %1281 = vmatprep.subr.mxu0 0.0
      %1282 = vmatpush2.msra.mxu0 0.0
      %1283 = vmatprep.subr.mxu0 0.0
      %1284 = vmatpush2.msra.mxu0 0.0
      %1285 = vmatprep.subr.mxu0 0.0
      %1286 = vmatpush2.msra.mxu0 0.0
      %1287 = vmatprep.subr.mxu0 0.0
      %1288 = vmatpush2.msra.mxu0 0.0
      %1289 = vmatprep.subr.mxu0 0.0
      %1290 = vmatpush2.msra.mxu0 0.0
      %1291 = vmatprep.mubr.f32.mxu0 0.0
      %1292 = vmatmul.mubr.f32.gmra.mxu0 %v1205
      %v1293 = vpop.f32.mrf.mxu0
      %v1294 = vadd.f32 0.0, %v1293
      %v1295 = vpop.f32.mrf.mxu0
      %1296 = vmatprep.mubr.f32.mxu0 0.0
      %1297 = vmatmul.mubr.f32.gmra.mxu0 %v1206
      %v1298 = vpop.f32.mrf.mxu0
      %v1299 = vadd.f32 0.0, %v1298
      %v1300 = vpop.f32.mrf.mxu0
      %1301 = vmatprep.mubr.f32.mxu0 0.0
      %1302 = vmatmul.mubr.f32.gmra.mxu0 %v1207
      %v1303 = vpop.f32.mrf.mxu0
      %v1304 = vadd.f32 0.0, %v1303
      %v1305 = vpop.f32.mrf.mxu0
      %1306 = vmatprep.mubr.f32.mxu0 0.0
      %1307 = vmatmul.mubr.f32.gmra.mxu0 %v1208
      %v1308 = vpop.f32.mrf.mxu0
      %v1309 = vadd.f32 0.0, %v1308
      %v1310 = vpop.f32.mrf.mxu0
      %1311 = vmatprep.mubr.f32.mxu0 0.0
      %1312 = vmatmul.mubr.f32.gmra.mxu0 %v1209
      %v1313 = vpop.f32.mrf.mxu0
      %v1314 = vadd.f32 0.0, %v1313
      %v1315 = vpop.f32.mrf.mxu0
      %1316 = vdwg.mxu0
      %v1317 = vadd.f32 %v1200, %v1294
      %v1318 = vadd.f32 %v1201, %v1299
      %v1319 = vadd.f32 %v1202, %v1304
      %v1320 = vadd.f32 %v1203, %v1309
      %v1321 = vadd.f32 %v1204, %v1314
      %v1322 = vld [vmem:[#allocation2 + $0x4] sm:$0xff]
      %v1323 = vld [vmem:[#allocation2 + $0xc] sm:$0xff]
      %v1324 = vld [vmem:[#allocation2 + $0x14] sm:$0xff]
      %v1325 = vld [vmem:[#allocation2 + $0x1c] sm:$0xff]
      %v1326 = vld [vmem:[#allocation2 + $0x24] sm:$0xf]
      %s1327 = scalar_lea.vmem [#allocation7], %s712
      %v1328 = vld [vmem:[%s1327] sm:$0xff]
      %v1329 = vld [vmem:[%s1327 + $0x8] sm:$0xff]
      %v1330 = vld [vmem:[%s1327 + $0x10] sm:$0xff]
      %v1331 = vld [vmem:[%s1327 + $0x18] sm:$0xff]
      %v1332 = vld [vmem:[%s1327 + $0x20] sm:$0xff]
      %v1333 = vld [vmem:[%s1327 + $0x28] sm:$0xff]
      %v1334 = vld [vmem:[%s1327 + $0x30] sm:$0xff]
      %v1335 = vld [vmem:[%s1327 + $0x38] sm:$0xff]
      %v1336 = vld [vmem:[%s1327 + $0x40] sm:$0xff]
      %v1337 = vld [vmem:[%s1327 + $0x48] sm:$0xff]
      %v1338 = vld [vmem:[%s1327 + $0x50] sm:$0xff]
      %v1339 = vld [vmem:[%s1327 + $0x58] sm:$0xff]
      %v1340 = vld [vmem:[%s1327 + $0x60] sm:$0xff]
      %v1341 = vld [vmem:[%s1327 + $0x68] sm:$0xff]
      %v1342 = vld [vmem:[%s1327 + $0x70] sm:$0xff]
      %v1343 = vld [vmem:[%s1327 + $0x78] sm:$0xff]
      %1344 = vmatprep.subr.mxu0 0.0
      %1345 = vmatpush1.msra.mxu0 %v1343
      %1346 = vmatprep.subr.mxu0 0.0
      %1347 = vmatpush1.msra.mxu0 %v1342
      %1348 = vmatprep.subr.mxu0 0.0
      %1349 = vmatpush1.msra.mxu0 %v1341
      %1350 = vmatprep.subr.mxu0 0.0
      %1351 = vmatpush1.msra.mxu0 %v1340
      %1352 = vmatprep.subr.mxu0 0.0
      %1353 = vmatpush1.msra.mxu0 %v1339
      %1354 = vmatprep.subr.mxu0 0.0
      %1355 = vmatpush1.msra.mxu0 %v1338
      %1356 = vmatprep.subr.mxu0 0.0
      %1357 = vmatpush1.msra.mxu0 %v1337
      %1358 = vmatprep.subr.mxu0 0.0
      %1359 = vmatpush1.msra.mxu0 %v1336
      %1360 = vmatprep.subr.mxu0 0.0
      %1361 = vmatpush1.msra.mxu0 %v1335
      %1362 = vmatprep.subr.mxu0 0.0
      %1363 = vmatpush1.msra.mxu0 %v1334
      %1364 = vmatprep.subr.mxu0 0.0
      %1365 = vmatpush1.msra.mxu0 %v1333
      %1366 = vmatprep.subr.mxu0 0.0
      %1367 = vmatpush1.msra.mxu0 %v1332
      %1368 = vmatprep.subr.mxu0 0.0
      %1369 = vmatpush1.msra.mxu0 %v1331
      %1370 = vmatprep.subr.mxu0 0.0
      %1371 = vmatpush1.msra.mxu0 %v1330
      %1372 = vmatprep.subr.mxu0 0.0
      %1373 = vmatpush1.msra.mxu0 %v1329
      %1374 = vmatprep.subr.mxu0 0.0
      %1375 = vmatpush1.msra.mxu0 %v1328
      %1376 = vmatprep.subr.mxu0 0.0
      %1377 = vmatpush2.msra.mxu0 0.0
      %1378 = vmatprep.subr.mxu0 0.0
      %1379 = vmatpush2.msra.mxu0 0.0
      %1380 = vmatprep.subr.mxu0 0.0
      %1381 = vmatpush2.msra.mxu0 0.0
      %1382 = vmatprep.subr.mxu0 0.0
      %1383 = vmatpush2.msra.mxu0 0.0
      %1384 = vmatprep.subr.mxu0 0.0
      %1385 = vmatpush2.msra.mxu0 0.0
      %1386 = vmatprep.subr.mxu0 0.0
      %1387 = vmatpush2.msra.mxu0 0.0
      %1388 = vmatprep.subr.mxu0 0.0
      %1389 = vmatpush2.msra.mxu0 0.0
      %1390 = vmatprep.subr.mxu0 0.0
      %1391 = vmatpush2.msra.mxu0 0.0
      %1392 = vmatprep.subr.mxu0 0.0
      %1393 = vmatpush2.msra.mxu0 0.0
      %1394 = vmatprep.subr.mxu0 0.0
      %1395 = vmatpush2.msra.mxu0 0.0
      %1396 = vmatprep.subr.mxu0 0.0
      %1397 = vmatpush2.msra.mxu0 0.0
      %1398 = vmatprep.subr.mxu0 0.0
      %1399 = vmatpush2.msra.mxu0 0.0
      %1400 = vmatprep.subr.mxu0 0.0
      %1401 = vmatpush2.msra.mxu0 0.0
      %1402 = vmatprep.subr.mxu0 0.0
      %1403 = vmatpush2.msra.mxu0 0.0
      %1404 = vmatprep.subr.mxu0 0.0
      %1405 = vmatpush2.msra.mxu0 0.0
      %1406 = vmatprep.subr.mxu0 0.0
      %1407 = vmatpush2.msra.mxu0 0.0
      %1408 = vmatprep.mubr.f32.mxu0 0.0
      %1409 = vmatmul.mubr.f32.gmra.mxu0 %v1322
      %v1410 = vpop.f32.mrf.mxu0
      %v1411 = vadd.f32 0.0, %v1410
      %v1412 = vpop.f32.mrf.mxu0
      %1413 = vmatprep.mubr.f32.mxu0 0.0
      %1414 = vmatmul.mubr.f32.gmra.mxu0 %v1323
      %v1415 = vpop.f32.mrf.mxu0
      %v1416 = vadd.f32 0.0, %v1415
      %v1417 = vpop.f32.mrf.mxu0
      %1418 = vmatprep.mubr.f32.mxu0 0.0
      %1419 = vmatmul.mubr.f32.gmra.mxu0 %v1324
      %v1420 = vpop.f32.mrf.mxu0
      %v1421 = vadd.f32 0.0, %v1420
      %v1422 = vpop.f32.mrf.mxu0
      %1423 = vmatprep.mubr.f32.mxu0 0.0
      %1424 = vmatmul.mubr.f32.gmra.mxu0 %v1325
      %v1425 = vpop.f32.mrf.mxu0
      %v1426 = vadd.f32 0.0, %v1425
      %v1427 = vpop.f32.mrf.mxu0
      %1428 = vmatprep.mubr.f32.mxu0 0.0
      %1429 = vmatmul.mubr.f32.gmra.mxu0 %v1326
      %v1430 = vpop.f32.mrf.mxu0
      %v1431 = vadd.f32 0.0, %v1430
      %v1432 = vpop.f32.mrf.mxu0
      %1433 = vdwg.mxu0
      %v1434 = vadd.f32 %v1317, %v1411
      %v1435 = vadd.f32 %v1318, %v1416
      %v1436 = vadd.f32 %v1319, %v1421
      %v1437 = vadd.f32 %v1320, %v1426
      %v1438 = vadd.f32 %v1321, %v1431
      %v1440 = vlaneseq
      %v1441 = vshrl.u32 %v1440, 7
      %v1442 = vsub.s32 0, %v1441
      %v1443 = vrot.slane %v863, %v1442
      %v1445 = vadd.f32 %v1434, %v1443
      %v1446 = vadd.f32 %v1435, %v1443
      %v1447 = vadd.f32 %v1436, %v1443
      %v1448 = vadd.f32 %v1437, %v1443
      %v1449 = vadd.f32 %v1438, %v1443
      %v1450 = vadd.f32 %v857, %v1445
      %v1451 = vadd.f32 %v858, %v1446
      %v1452 = vadd.f32 %v859, %v1447
      %v1453 = vadd.f32 %v860, %v1448
      %v1454 = vadd.f32 %v861, %v1449
      %1455 = vst [vmem:[#allocation3] sm:$0xff] %v1450
      %1456 = vst [vmem:[#allocation3 + $0x8] sm:$0xff] %v1451
      %1457 = vst [vmem:[#allocation3 + $0x10] sm:$0xff] %v1452
      %1458 = vst [vmem:[#allocation3 + $0x18] sm:$0xff] %v1453
      %1459 = vst [vmem:[#allocation3 + $0x20] sm:$0xf] %v1454
    $region54: #{tpu_custom_call.1} parent=1 // loop_footer
      %s226 = sadd.s32 1, %s222
    $region55: #{tpu_custom_call.1} parent=1 // loop_footer_branch
      %221 = sbr.rel target = $region51
    $region56: #{tpu_custom_call.1} parent=1 // loop_exit
      _
    %v1460 = vld [vmem:[#allocation3] sm:$0xff]
    %v1461 = vld [vmem:[#allocation3 + $0x8] sm:$0xff]
    %v1462 = vld [vmem:[#allocation3 + $0x10] sm:$0xff]
    %v1463 = vld [vmem:[#allocation3 + $0x18] sm:$0xff]
    %v1464 = vld [vmem:[#allocation3 + $0x20] sm:$0xf]
    %v1465 = vld [vmem:[#allocation9] sm:$0xff]
    %v1466 = vld [vmem:[#allocation9 + $0x8] sm:$0xff]
    %v1467 = vld [vmem:[#allocation9 + $0x10] sm:$0xff]
    %v1468 = vld [vmem:[#allocation9 + $0x18] sm:$0xff]
    %v1469 = vld [vmem:[#allocation9 + $0x20] sm:$0xff]
    %v1470 = vld [vmem:[#allocation9 + $0x28] sm:$0xff]
    %v1471 = vld [vmem:[#allocation9 + $0x30] sm:$0xff]
    %v1472 = vld [vmem:[#allocation9 + $0x38] sm:$0xff]
    %v1473 = vld [vmem:[#allocation9 + $0x40] sm:$0xff]
    %v1474 = vld [vmem:[#allocation9 + $0x48] sm:$0xff]
    %v1475 = vld [vmem:[#allocation9 + $0x50] sm:$0xff]
    %v1476 = vld [vmem:[#allocation9 + $0x58] sm:$0xff]
    %v1477 = vld [vmem:[#allocation9 + $0x60] sm:$0xff]
    %v1478 = vld [vmem:[#allocation9 + $0x68] sm:$0xff]
    %v1479 = vld [vmem:[#allocation9 + $0x70] sm:$0xff]
    %v1480 = vld [vmem:[#allocation9 + $0x78] sm:$0xff]
    %v1481 = vld [vmem:[%s8] sm:$0x1]
    %v1483 = vlaneseq
    %v1484 = vshrl.u32 %v1483, 7
    %v1485 = vsub.s32 0, %v1484
    %v1486 = vrot.slane %v1481, %v1485
    %1488 = vmatprep.subr.mxu0 0.0
    %1489 = vmatpush1.msra.mxu0 %v1480
    %1490 = vmatprep.subr.mxu0 0.0
    %1491 = vmatpush1.msra.mxu0 %v1479
    %1492 = vmatprep.subr.mxu0 0.0
    %1493 = vmatpush1.msra.mxu0 %v1478
    %1494 = vmatprep.subr.mxu0 0.0
    %1495 = vmatpush1.msra.mxu0 %v1477
    %1496 = vmatprep.subr.mxu0 0.0
    %1497 = vmatpush1.msra.mxu0 %v1476
    %1498 = vmatprep.subr.mxu0 0.0
    %1499 = vmatpush1.msra.mxu0 %v1475
    %1500 = vmatprep.subr.mxu0 0.0
    %1501 = vmatpush1.msra.mxu0 %v1474
    %1502 = vmatprep.subr.mxu0 0.0
    %1503 = vmatpush1.msra.mxu0 %v1473
    %1504 = vmatprep.subr.mxu0 0.0
    %1505 = vmatpush1.msra.mxu0 %v1472
    %1506 = vmatprep.subr.mxu0 0.0
    %1507 = vmatpush1.msra.mxu0 %v1471
    %1508 = vmatprep.subr.mxu0 0.0
    %1509 = vmatpush1.msra.mxu0 %v1470
    %1510 = vmatprep.subr.mxu0 0.0
    %1511 = vmatpush1.msra.mxu0 %v1469
    %1512 = vmatprep.subr.mxu0 0.0
    %1513 = vmatpush1.msra.mxu0 %v1468
    %1514 = vmatprep.subr.mxu0 0.0
    %1515 = vmatpush1.msra.mxu0 %v1467
    %1516 = vmatprep.subr.mxu0 0.0
    %1517 = vmatpush1.msra.mxu0 %v1466
    %1518 = vmatprep.subr.mxu0 0.0
    %1519 = vmatpush1.msra.mxu0 %v1465
    %1520 = vmatprep.subr.mxu0 0.0
    %1521 = vmatpush2.msra.mxu0 0.0
    %1522 = vmatprep.subr.mxu0 0.0
    %1523 = vmatpush2.msra.mxu0 0.0
    %1524 = vmatprep.subr.mxu0 0.0
    %1525 = vmatpush2.msra.mxu0 0.0
    %1526 = vmatprep.subr.mxu0 0.0
    %1527 = vmatpush2.msra.mxu0 0.0
    %1528 = vmatprep.subr.mxu0 0.0
    %1529 = vmatpush2.msra.mxu0 0.0
    %1530 = vmatprep.subr.mxu0 0.0
    %1531 = vmatpush2.msra.mxu0 0.0
    %1532 = vmatprep.subr.mxu0 0.0
    %1533 = vmatpush2.msra.mxu0 0.0
    %1534 = vmatprep.subr.mxu0 0.0
    %1535 = vmatpush2.msra.mxu0 0.0
    %1536 = vmatprep.subr.mxu0 0.0
    %1537 = vmatpush2.msra.mxu0 0.0
    %1538 = vmatprep.subr.mxu0 0.0
    %1539 = vmatpush2.msra.mxu0 0.0
    %1540 = vmatprep.subr.mxu0 0.0
    %1541 = vmatpush2.msra.mxu0 0.0
    %1542 = vmatprep.subr.mxu0 0.0
    %1543 = vmatpush2.msra.mxu0 0.0
    %1544 = vmatprep.subr.mxu0 0.0
    %1545 = vmatpush2.msra.mxu0 0.0
    %1546 = vmatprep.subr.mxu0 0.0
    %1547 = vmatpush2.msra.mxu0 0.0
    %1548 = vmatprep.subr.mxu0 0.0
    %1549 = vmatpush2.msra.mxu0 0.0
    %1550 = vmatprep.subr.mxu0 0.0
    %1551 = vmatpush2.msra.mxu0 0.0
    %1552 = vmatprep.mubr.f32.mxu0 0.0
    %1553 = vmatmul.mubr.f32.gmra.mxu0 %v1460
    %v1554 = vpop.f32.mrf.mxu0
    %v1555 = vadd.f32 %v1486, %v1554
    %v1556 = vpop.f32.mrf.mxu0
    %1557 = vmatprep.mubr.f32.mxu0 0.0
    %1558 = vmatmul.mubr.f32.gmra.mxu0 %v1461
    %v1559 = vpop.f32.mrf.mxu0
    %v1560 = vadd.f32 %v1486, %v1559
    %v1561 = vpop.f32.mrf.mxu0
    %1562 = vmatprep.mubr.f32.mxu0 0.0
    %1563 = vmatmul.mubr.f32.gmra.mxu0 %v1462
    %v1564 = vpop.f32.mrf.mxu0
    %v1565 = vadd.f32 %v1486, %v1564
    %v1566 = vpop.f32.mrf.mxu0
    %1567 = vmatprep.mubr.f32.mxu0 0.0
    %1568 = vmatmul.mubr.f32.gmra.mxu0 %v1463
    %v1569 = vpop.f32.mrf.mxu0
    %v1570 = vadd.f32 %v1486, %v1569
    %v1571 = vpop.f32.mrf.mxu0
    %1572 = vmatprep.mubr.f32.mxu0 0.0
    %1573 = vmatmul.mubr.f32.gmra.mxu0 %v1464
    %v1574 = vpop.f32.mrf.mxu0
    %v1575 = vadd.f32 %v1486, %v1574
    %v1576 = vpop.f32.mrf.mxu0
    %1577 = vdwg.mxu0
    %vm1578 = vcmp.ge.f32.partialorder %v1555, 0.0
    %vm1579 = vcmp.ge.f32.partialorder %v1560, 0.0
    %vm1580 = vcmp.ge.f32.partialorder %v1565, 0.0
    %vm1581 = vcmp.ge.f32.partialorder %v1570, 0.0
    %vm1582 = vcmp.ge.f32.partialorder %v1575, 0.0
    %v1583 = vmul.f32 %v1555, 0.01
    %v1584 = vmul.f32 %v1560, 0.01
    %v1585 = vmul.f32 %v1565, 0.01
    %v1586 = vmul.f32 %v1570, 0.01
    %v1587 = vmul.f32 %v1575, 0.01
    %v1588 = vsel %vm1578, %v1555, %v1583
    %v1589 = vsel %vm1579, %v1560, %v1584
    %v1590 = vsel %vm1580, %v1565, %v1585
    %v1591 = vsel %vm1581, %v1570, %v1586
    %v1592 = vsel %vm1582, %v1575, %v1587
    %1593 = vst [vmem:[#allocation10] sm:$0xff] %v1588
    %1594 = vst [vmem:[#allocation10 + $0x8] sm:$0xff] %v1589
    %1595 = vst [vmem:[#allocation10 + $0x10] sm:$0xff] %v1590
    %1596 = vst [vmem:[#allocation10 + $0x18] sm:$0xff] %v1591
    %1597 = vst [vmem:[#allocation10 + $0x20] sm:$0xf] %v1592
    // Predicated region
    $region57: #{tpu_custom_call.1} parent=1 // pred_check
      _
    $region58: #{tpu_custom_call.1} parent=1 // pred_check_branch
      %1599 = sbr.rel (0) target = $region60
    $region59: #{tpu_custom_call.1} parent=1 // pred_region
      %s1601 = ssub.s32 640, 640
      %1602 = vsyncadd [#allocation6], %s1601
      %s1603 = sshll.u32 [#allocation10], 4
      %s1604 = int_to_ptr.vmem [resolvable:$true] %s1603
      %1609 = dma.vmem_to_hbm [thread:$0]  %s1604, 640, %s9, [#allocation6], 128, 128, 8
    $region60: #{tpu_custom_call.1} parent=1 // pred_fallthru
      _
    // Predicated region
    $region61: #{tpu_custom_call.1} parent=1 // pred_check
      _
    $region62: #{tpu_custom_call.1} parent=1 // pred_check_branch
      %1611 = sbr.rel (0) target = $region64
    $region63: #{tpu_custom_call.1} parent=1 // pred_region
      %1612 = dma.done [#allocation6], 640
    $region64: #{tpu_custom_call.1} parent=1 // pred_fallthru
      _
    %1613 = vsyncpa [#allocation5], 1
    %1614 = vsyncpa [#allocation8], 1
    %1615 = vsyncpa [#allocation6], 1

</llo_original>
